<compile_context>
chip_gen: v7x
topology: tpu7x:2x2x1
jax: 0.10.0
libtpu: 0.0.40
codegen_flags: <defaults>
</compile_context>

<pallas_src>
import functools

import jax
import jax.numpy as jnp
from jax.experimental import pallas as pl
from jax.experimental.pallas import tpu as pltpu


def _round_up(x, m):
    return ((x + m - 1) // m) * m


def _dual_loss_kernel(tgt_ref, cat_ref, dense_ref, labels_ref, out_ref,
                      ce_acc, bce_acc, *,
                      batch, dense_dim, tile_rows, tiles_per_core, w0, w1):
    c = pl.program_id(0)          # core (parallel) axis
    j = pl.program_id(1)          # batch-tile (reduction) axis

    @pl.when(j == 0)
    def _init():
        ce_acc[...] = jnp.zeros_like(ce_acc)
        bce_acc[...] = jnp.zeros_like(bce_acc)

    # Row-validity mask for the zero-padded tail of the batch.
    row0 = (c * tiles_per_core + j) * tile_rows
    row_ids = row0 + jax.lax.broadcasted_iota(jnp.int32, (tile_rows, 1), 0)
    valid = (row_ids < batch).astype(jnp.float32)                # (TB, 1)

    tgt = tgt_ref[...]                                           # (TB, 1) int32
    x = cat_ref[...].astype(jnp.float32)                         # (TB, C)
    z = dense_ref[...].astype(jnp.float32)                       # (TB, D)
    labels = labels_ref[...].astype(jnp.float32)                 # (C, D)

    # In-register one-hot(target): removes the (B, C) HBM stream.
    col_ids = jax.lax.broadcasted_iota(jnp.int32, x.shape, 1)
    onehot = (col_ids == tgt).astype(jnp.float32)                # (TB, C)

    # ---- categorical cross-entropy partial: sum_i (lse_i - x_i[t_i]) ----
    m = jnp.max(x, axis=-1, keepdims=True)
    lse = m + jnp.log(jnp.sum(jnp.exp(x - m), axis=-1, keepdims=True))
    picked = jnp.sum(x * onehot, axis=-1, keepdims=True)
    ce_rows = (lse - picked) * valid                             # (TB, 1)
    ce_acc[...] += jnp.sum(ce_rows, axis=0, keepdims=True)

    # ---- BCE-with-logits partial with the label gather fused:
    #   sum(max(z,0) + log(1+exp(-|z|))) - sum_i z_i . dense_labels[t_i]
    elem = jnp.maximum(z, 0.0) + jnp.log(1.0 + jnp.exp(-jnp.abs(z)))
    elem_rows = jnp.sum(elem, axis=-1, keepdims=True) * valid    # (TB, 1)
    zl = jnp.einsum('td,cd->tc', z, labels,
                    preferred_element_type=jnp.float32)          # (TB, C)
    zy_rows = jnp.sum(zl * onehot, axis=-1, keepdims=True) * valid
    bce_acc[...] += jnp.sum(elem_rows - zy_rows, axis=0, keepdims=True)

    @pl.when(j == tiles_per_core - 1)
    def _finalize():
        part = (ce_acc[...] * (w0 / batch)
                + bce_acc[...] * (w1 / (batch * dense_dim)))
        out_ref[...] = jnp.broadcast_to(part, out_ref.shape).astype(jnp.float32)


def dual_loss_learn(cat_logits, dense_logits, target, dense_labels, weights,
                    *, tile_rows=512, n_cores=2):
    """Pallas implementation of DualLossLearn.forward (accumulate=False)."""
    B, C = cat_logits.shape
    Bd, D = dense_logits.shape
    assert B == Bd
    Cl, Dl = dense_labels.shape
    assert Cl == C and Dl == D

    # Batch tile: TB=512 keeps 2 pipeline buffers of the dominant (TB, 4096)
    # f32 dense stream at 16 MiB — safe on v7x's 64 MiB VMEM; bump on v5e/v6e.
    tb = max(8, min(_round_up(tile_rows, 8), _round_up(B, 8)))
    n_tiles = pl.cdiv(B, tb)
    tiles_per_core = pl.cdiv(n_tiles, n_cores)
    padded_B = n_cores * tiles_per_core * tb

    def pad_rows(a):
        pad = padded_B - a.shape[0]
        if pad == 0:
            return a
        return jnp.pad(a, ((0, pad),) + ((0, 0),) * (a.ndim - 1))

    tgt2d = pad_rows(target.astype(jnp.int32).reshape(B, 1))
    cat_p = pad_rows(cat_logits)
    dense_p = pad_rows(dense_logits)

    kernel = functools.partial(
        _dual_loss_kernel,
        batch=B, dense_dim=D, tile_rows=tb, tiles_per_core=tiles_per_core,
        w0=float(weights[0]), w1=float(weights[1]))

    row_map = lambda c, j: (c * tiles_per_core + j, 0)

    out = pl.pallas_call(
        kernel,
        out_shape=jax.ShapeDtypeStruct((n_cores * 8, 128), jnp.float32),
        grid_spec=pltpu.PrefetchScalarGridSpec(
            num_scalar_prefetch=0,
            grid=(n_cores, tiles_per_core),
            in_specs=[
                pl.BlockSpec((tb, 1), row_map),              # target ids
                pl.BlockSpec((tb, C), row_map),              # categorical logits
                pl.BlockSpec((tb, D), row_map),              # dense logits
                pl.BlockSpec((C, D), lambda c, j: (0, 0)),   # labels, VMEM-resident
            ],
            out_specs=pl.BlockSpec((8, 128), lambda c, j: (c, 0)),
            scratch_shapes=[pltpu.VMEM((1, 1), jnp.float32),   # ce partial sum
                            pltpu.VMEM((1, 1), jnp.float32)],  # bce partial sum
        ),
        compiler_params=pltpu.CompilerParams(
            dimension_semantics=("parallel", "arbitrary"),
            vmem_limit_bytes=64 * 1024 * 1024),
    )(tgt2d, cat_p, dense_p, dense_labels)

    # Per-core partials are already weighted/normalized (linear), just add.
    return jnp.sum(out[0::8, 0])


def _reference(cat_logits, dense_logits, target, dense_labels, weights):
    # pure-JAX reference for validation
    dense_target = jnp.take(dense_labels, target, axis=0)
    lse = jax.scipy.special.logsumexp(cat_logits.astype(jnp.float32), axis=-1)
    picked = jnp.take_along_axis(cat_logits, target[:, None], axis=-1)[:, 0]
    ce = jnp.mean(lse - picked)
    z, y = dense_logits.astype(jnp.float32), dense_target.astype(jnp.float32)
    bce = jnp.mean(jnp.maximum(z, 0.0) - z * y + jnp.log1p(jnp.exp(-jnp.abs(z))))
    return ce * weights[0] + bce * weights[1]


if __name__ == "__main__":
    # Small, deterministic setup.
    # NOTE: self.categorical_loss is a constructor argument in the PyTorch
    # module; we use the standard CrossEntropyLoss (mean reduction).
    B = 8               # batch
    NUM_CLASSES = 16    # module default is 397; kept small here
    DENSE_DIM = 4096    # fixed at 4096 in the module
    WEIGHTS = (1.0, 0.5)

    key = jax.random.PRNGKey(0)
    k1, k2, k3, k4 = jax.random.split(key, 4)

    # deterministic "random" dense labels in {0, 1}, as in __init__
    dense_labels = jax.random.bernoulli(
        k1, 0.5, (NUM_CLASSES, DENSE_DIM)).astype(jnp.float32)

    cat_logits = jax.random.normal(k2, (B, NUM_CLASSES), dtype=jnp.float32)
    dense_logits = jax.random.normal(k3, (B, DENSE_DIM), dtype=jnp.float32)
    target = jax.random.randint(k4, (B,), 0, NUM_CLASSES, dtype=jnp.int32)

    loss = dual_loss_learn(cat_logits, dense_logits, target, dense_labels, WEIGHTS)
    loss = jax.block_until_ready(loss)

    ref = _reference(cat_logits, dense_logits, target, dense_labels, WEIGHTS)
    assert jnp.allclose(loss, ref, rtol=1e-5, atol=1e-5), (loss, ref)

    # TODO(synk): the accumulate=True branch mutates Python-side running sums
    # (dense_output_sum / total_accumulated) and seperate=True returns the two
    # losses un-summed; that stateful/branching bookkeeping is left out.
    print("KERNEL_OK")
</pallas_src>

<mosaic_0001>
module attributes {stable_mosaic.version = 11 : i64} {
  func.func @_dual_loss_kernel(%arg0: i32, %arg1: i32, %arg2: memref<8x1xi32, #tpu.memory_space<vmem>>, %arg3: memref<8x16xf32, #tpu.memory_space<vmem>>, %arg4: memref<8x4096xf32, #tpu.memory_space<vmem>>, %arg5: memref<16x4096xf32, #tpu.memory_space<vmem>>, %arg6: memref<8x128xf32, #tpu.memory_space<vmem>>, %arg7: memref<1x1xf32, #tpu.memory_space<vmem>>, %arg8: memref<1x1xf32, #tpu.memory_space<vmem>>) attributes {dimension_semantics = [#tpu.dimension_semantics<parallel>, #tpu.dimension_semantics<arbitrary>], iteration_bounds = array<i64: 2, 1>, scalar_prefetch = 0 : i64, scratch_operands = 2 : i64, tpu.core_type = #tpu.core_type<tc>, window_params = [{transform_indices = @transform_0, window_bounds = array<i64: 8, 1>}, {transform_indices = @transform_1, window_bounds = array<i64: 8, 16>}, {transform_indices = @transform_2, window_bounds = array<i64: 8, 4096>}, {pipeline_mode = #tpu.pipeline_mode<synchronous>, transform_indices = @transform_3, window_bounds = array<i64: 16, 4096>}, {transform_indices = @transform_4, window_bounds = array<i64: 8, 128>}]} {
    %c0_i32 = arith.constant 0 : i32
    %0 = arith.cmpi eq, %arg1, %c0_i32 : i32
    %1 = arith.extui %0 : i1 to i32
    %c0_i32_0 = arith.constant 0 : i32
    %2 = arith.cmpi ne, %1, %c0_i32_0 : i32
    scf.if %2 {
      %cst_29 = arith.constant 0.000000e+00 : f32
      %68 = vector.broadcast %cst_29 : f32 to vector<1x1xf32>
      %c0_30 = arith.constant 0 : index
      %c0_31 = arith.constant 0 : index
      %69 = vector.load %arg7[%c0_30, %c0_31] : memref<1x1xf32, #tpu.memory_space<vmem>>, vector<1x1xf32>
      tpu.vector_store %arg7[%c0_30, %c0_31], %68 {strides = array<i32>} : memref<1x1xf32, #tpu.memory_space<vmem>>, vector<1x1xf32>,
      %cst_32 = arith.constant 0.000000e+00 : f32
      %70 = vector.broadcast %cst_32 : f32 to vector<1x1xf32>
      %c0_33 = arith.constant 0 : index
      %c0_34 = arith.constant 0 : index
      %71 = vector.load %arg8[%c0_33, %c0_34] : memref<1x1xf32, #tpu.memory_space<vmem>>, vector<1x1xf32>
      tpu.vector_store %arg8[%c0_33, %c0_34], %70 {strides = array<i32>} : memref<1x1xf32, #tpu.memory_space<vmem>>, vector<1x1xf32>,
    } else {
    }
    %c1_i32 = arith.constant 1 : i32
    %3 = arith.muli %arg0, %c1_i32 : i32
    %4 = arith.addi %3, %arg1 : i32
    %c8_i32 = arith.constant 8 : i32
    %5 = arith.muli %4, %c8_i32 : i32
    %6 = tpu.iota {dimensions = array<i32: 0>} : vector<8x1xi32>
    %7 = vector.broadcast %5 : i32 to vector<8x1xi32>
    %8 = arith.addi %7, %6 : vector<8x1xi32>
    %c8_i32_1 = arith.constant 8 : i32
    %9 = vector.broadcast %c8_i32_1 : i32 to vector<8x1xi32>
    %10 = arith.cmpi slt, %8, %9 : vector<8x1xi32>
    %11 = arith.extui %10 : vector<8x1xi1> to vector<8x1xi32>
    %12 = arith.sitofp %11 : vector<8x1xi32> to vector<8x1xf32>
    %c0 = arith.constant 0 : index
    %c0_2 = arith.constant 0 : index
    %13 = vector.load %arg2[%c0, %c0_2] : memref<8x1xi32, #tpu.memory_space<vmem>>, vector<8x1xi32>
    %c0_3 = arith.constant 0 : index
    %c0_4 = arith.constant 0 : index
    %14 = vector.load %arg3[%c0_3, %c0_4] : memref<8x16xf32, #tpu.memory_space<vmem>>, vector<8x16xf32>
    %c0_5 = arith.constant 0 : index
    %c0_6 = arith.constant 0 : index
    %15 = vector.load %arg4[%c0_5, %c0_6] : memref<8x4096xf32, #tpu.memory_space<vmem>>, vector<8x4096xf32>
    %c0_7 = arith.constant 0 : index
    %c0_8 = arith.constant 0 : index
    %16 = vector.load %arg5[%c0_7, %c0_8] : memref<16x4096xf32, #tpu.memory_space<vmem>>, vector<16x4096xf32>
    %17 = tpu.iota {dimensions = array<i32: 1>} : vector<8x16xi32>
    %18 = vector.broadcast %13 : vector<8x1xi32> to vector<8x16xi32>
    %19 = arith.cmpi eq, %17, %18 : vector<8x16xi32>
    %20 = arith.extui %19 : vector<8x16xi1> to vector<8x16xi32>
    %21 = arith.sitofp %20 : vector<8x16xi32> to vector<8x16xf32>
    %cst = arith.constant dense<0xFF800000> : vector<8xf32>
    %22 = vector.multi_reduction <maximumf>, %14, %cst [1] : vector<8x16xf32> to vector<8xf32>
    %23 = vector.shape_cast %22 : vector<8xf32> to vector<8x1xf32>
    %24 = vector.broadcast %23 : vector<8x1xf32> to vector<8x16xf32>
    %25 = arith.subf %14, %24 : vector<8x16xf32>
    %26 = math.exp %25 : vector<8x16xf32>
    %cst_9 = arith.constant dense<0.000000e+00> : vector<8xf32>
    %27 = vector.multi_reduction <add>, %26, %cst_9 [1] : vector<8x16xf32> to vector<8xf32>
    %28 = vector.shape_cast %27 : vector<8xf32> to vector<8x1xf32>
    %29 = math.log %28 : vector<8x1xf32>
    %30 = arith.addf %23, %29 : vector<8x1xf32>
    %31 = arith.mulf %14, %21 : vector<8x16xf32>
    %cst_10 = arith.constant dense<0.000000e+00> : vector<8xf32>
    %32 = vector.multi_reduction <add>, %31, %cst_10 [1] : vector<8x16xf32> to vector<8xf32>
    %33 = vector.shape_cast %32 : vector<8xf32> to vector<8x1xf32>
    %34 = arith.subf %30, %33 : vector<8x1xf32>
    %35 = arith.mulf %34, %12 : vector<8x1xf32>
    %c0_11 = arith.constant 0 : index
    %c0_12 = arith.constant 0 : index
    %36 = vector.load %arg7[%c0_11, %c0_12] : memref<1x1xf32, #tpu.memory_space<vmem>>, vector<1x1xf32>
    %cst_13 = arith.constant dense<0.000000e+00> : vector<1xf32>
    %37 = vector.multi_reduction <add>, %35, %cst_13 [0] : vector<8x1xf32> to vector<1xf32>
    %38 = vector.shape_cast %37 : vector<1xf32> to vector<1x1xf32>
    %39 = arith.addf %36, %38 : vector<1x1xf32>
    %c0_14 = arith.constant 0 : index
    %c0_15 = arith.constant 0 : index
    %40 = vector.load %arg7[%c0_14, %c0_15] : memref<1x1xf32, #tpu.memory_space<vmem>>, vector<1x1xf32>
    tpu.vector_store %arg7[%c0_14, %c0_15], %39 {strides = array<i32>} : memref<1x1xf32, #tpu.memory_space<vmem>>, vector<1x1xf32>,
    %cst_16 = arith.constant 0.000000e+00 : f32
    %41 = vector.broadcast %cst_16 : f32 to vector<8x4096xf32>
    %42 = arith.maximumf %15, %41 : vector<8x4096xf32>
    %43 = math.absf %15 : vector<8x4096xf32>
    %cst_17 = arith.constant 0.000000e+00 : f32
    %44 = vector.broadcast %cst_17 : f32 to vector<8x4096xf32>
    %45 = arith.subf %44, %43 : vector<8x4096xf32>
    %46 = math.exp %45 : vector<8x4096xf32>
    %cst_18 = arith.constant 1.000000e+00 : f32
    %47 = vector.broadcast %cst_18 : f32 to vector<8x4096xf32>
    %48 = arith.addf %47, %46 : vector<8x4096xf32>
    %49 = math.log %48 : vector<8x4096xf32>
    %50 = arith.addf %42, %49 : vector<8x4096xf32>
    %cst_19 = arith.constant dense<0.000000e+00> : vector<8xf32>
    %51 = vector.multi_reduction <add>, %50, %cst_19 [1] : vector<8x4096xf32> to vector<8xf32>
    %52 = vector.shape_cast %51 : vector<8xf32> to vector<8x1xf32>
    %53 = arith.mulf %52, %12 : vector<8x1xf32>
    "tpu.trace_start"() <{level = 10 : i32, message = "td,cd->tc"}> : () -> ()
    %cst_20 = arith.constant dense<0.000000e+00> : vector<8x16xf32>
    %54 = tpu.matmul %15, %16, %cst_20 {dimension_numbers = #tpu.dot_dimension_numbers<[1], [1], [0], [0], [0, 0, 1, 0], [], []>} : vector<8x4096xf32>, vector<16x4096xf32>, vector<8x16xf32> -> vector<8x16xf32>
    "tpu.trace_stop"() : () -> ()
    %55 = arith.mulf %54, %21 : vector<8x16xf32>
    %cst_21 = arith.constant dense<0.000000e+00> : vector<8xf32>
    %56 = vector.multi_reduction <add>, %55, %cst_21 [1] : vector<8x16xf32> to vector<8xf32>
    %57 = vector.shape_cast %56 : vector<8xf32> to vector<8x1xf32>
    %58 = arith.mulf %57, %12 : vector<8x1xf32>
    %c0_22 = arith.constant 0 : index
    %c0_23 = arith.constant 0 : index
    %59 = vector.load %arg8[%c0_22, %c0_23] : memref<1x1xf32, #tpu.memory_space<vmem>>, vector<1x1xf32>
    %60 = arith.subf %53, %58 : vector<8x1xf32>
    %cst_24 = arith.constant dense<0.000000e+00> : vector<1xf32>
    %61 = vector.multi_reduction <add>, %60, %cst_24 [0] : vector<8x1xf32> to vector<1xf32>
    %62 = vector.shape_cast %61 : vector<1xf32> to vector<1x1xf32>
    %63 = arith.addf %59, %62 : vector<1x1xf32>
    %c0_25 = arith.constant 0 : index
    %c0_26 = arith.constant 0 : index
    %64 = vector.load %arg8[%c0_25, %c0_26] : memref<1x1xf32, #tpu.memory_space<vmem>>, vector<1x1xf32>
    tpu.vector_store %arg8[%c0_25, %c0_26], %63 {strides = array<i32>} : memref<1x1xf32, #tpu.memory_space<vmem>>, vector<1x1xf32>,
    %c0_i32_27 = arith.constant 0 : i32
    %65 = arith.cmpi eq, %arg1, %c0_i32_27 : i32
    %66 = arith.extui %65 : i1 to i32
    %c0_i32_28 = arith.constant 0 : i32
    %67 = arith.cmpi ne, %66, %c0_i32_28 : i32
    scf.if %67 {
      %c0_29 = arith.constant 0 : index
      %c0_30 = arith.constant 0 : index
      %68 = vector.load %arg7[%c0_29, %c0_30] : memref<1x1xf32, #tpu.memory_space<vmem>>, vector<1x1xf32>
      %cst_31 = arith.constant 1.250000e-01 : f32
      %69 = vector.broadcast %cst_31 : f32 to vector<1x1xf32>
      %70 = arith.mulf %68, %69 : vector<1x1xf32>
      %c0_32 = arith.constant 0 : index
      %c0_33 = arith.constant 0 : index
      %71 = vector.load %arg8[%c0_32, %c0_33] : memref<1x1xf32, #tpu.memory_space<vmem>>, vector<1x1xf32>
      %cst_34 = arith.constant 1.52587891E-5 : f32
      %72 = vector.broadcast %cst_34 : f32 to vector<1x1xf32>
      %73 = arith.mulf %71, %72 : vector<1x1xf32>
      %74 = arith.addf %70, %73 : vector<1x1xf32>
      %75 = vector.shape_cast %74 : vector<1x1xf32> to vector<1x1xf32>
      %76 = vector.broadcast %75 : vector<1x1xf32> to vector<8x128xf32>
      %c0_35 = arith.constant 0 : index
      %c0_36 = arith.constant 0 : index
      %77 = vector.load %arg6[%c0_35, %c0_36] : memref<8x128xf32, #tpu.memory_space<vmem>>, vector<8x128xf32>
      tpu.vector_store %arg6[%c0_35, %c0_36], %76 {strides = array<i32>} : memref<8x128xf32, #tpu.memory_space<vmem>>, vector<8x128xf32>,
    } else {
    }
    return
  }
  func.func @transform_0(%arg0: i32, %arg1: i32) -> (i32, i32) {
    %c1_i32 = arith.constant 1 : i32
    %0 = arith.muli %arg0, %c1_i32 : i32
    %1 = arith.addi %0, %arg1 : i32
    %c0_i32 = arith.constant 0 : i32
    %c0_i32_0 = arith.constant 0 : i32
    return %1, %c0_i32 : i32, i32
  }
  func.func @transform_1(%arg0: i32, %arg1: i32) -> (i32, i32) {
    %c1_i32 = arith.constant 1 : i32
    %0 = arith.muli %arg0, %c1_i32 : i32
    %1 = arith.addi %0, %arg1 : i32
    %c0_i32 = arith.constant 0 : i32
    %c0_i32_0 = arith.constant 0 : i32
    return %1, %c0_i32 : i32, i32
  }
  func.func @transform_2(%arg0: i32, %arg1: i32) -> (i32, i32) {
    %c1_i32 = arith.constant 1 : i32
    %0 = arith.muli %arg0, %c1_i32 : i32
    %1 = arith.addi %0, %arg1 : i32
    %c0_i32 = arith.constant 0 : i32
    %c0_i32_0 = arith.constant 0 : i32
    return %1, %c0_i32 : i32, i32
  }
  func.func @transform_3(%arg0: i32, %arg1: i32) -> (i32, i32) {
    %c0_i32 = arith.constant 0 : i32
    %c0_i32_0 = arith.constant 0 : i32
    %c0_i32_1 = arith.constant 0 : i32
    return %c0_i32, %c0_i32_0 : i32, i32
  }
  func.func @transform_4(%arg0: i32, %arg1: i32) -> (i32, i32) {
    %c0_i32 = arith.constant 0 : i32
    %c0_i32_0 = arith.constant 0 : i32
    return %arg0, %c0_i32 : i32, i32
  }
}

</mosaic_0001>

<llo_original>
// kernel: tpu_custom_call.1
$region0: #{tpu_custom_call.1}
  #allocation0 [shape = 'u32[]', space=smem, size = 0x4, offset = 0x4, fixed_abs, tag = 'smem constant byte address 0x4 - core index']
  #allocation1 [shape = 'u32[144,128]{1,0:T(1,128)}', space=vmem, size = 0x12000, scoped, tag = 'internal scratch']
  #allocation2 [shape = 'f32[1,1]{1,0:T(1,128)}', space=vmem, size = 0x200, scoped, tag = 'scratch operand']
  #allocation3 [shape = 'f32[1,1]{1,0:T(1,128)}', space=vmem, size = 0x200, scoped, tag = 'scratch operand']
  %s0 = inlined_call_operand.hbm [shape: s32[16,1], index: 0, kind: input, shape index: {}]
  %s1 = inlined_call_operand.hbm [shape: f32[16,16], index: 1, kind: input, shape index: {}]
  %s2 = inlined_call_operand.hbm [shape: f32[16,4096], index: 2, kind: input, shape index: {}]
  %s3 = inlined_call_operand.hbm [shape: f32[16,4096], index: 3, kind: input, shape index: {}]
  %s4 = inlined_call_operand.hbm [shape: f32[16,128], index: 4, kind: output, shape index: {}]
  %s5 = sld [smem:[#allocation0]]
  $region73: #{tpu_custom_call.1} parent=0
    _
  %s7 = ssub.s32 1, %s5
  %s8 = scalar_select 0, %s7, %s5
  $region1: #{tpu_custom_call.1} parent=0
    #allocation4 [shape = 'u8[8192]{0}', space=vmem, size = 0x2000, scoped, tag = 'input window, operand 0']
    #allocation5 [shape = 's32[2]{0}', space=sflag, size = 0x8, scoped, tag = 'scoped memory for tpu_custom_call.1']
    #allocation6 [shape = 's32[2]{0}', space=sflag, size = 0x8, scoped, tag = 'scoped memory for tpu_custom_call.1']
    #allocation7 [shape = 'u8[8192]{0}', space=vmem, size = 0x2000, scoped, tag = 'input window, operand 1']
    #allocation8 [shape = 's32[2]{0}', space=sflag, size = 0x8, scoped, tag = 'scoped memory for tpu_custom_call.1']
    #allocation9 [shape = 'u8[262144]{0}', space=vmem, size = 0x40000, scoped, tag = 'input window, operand 2']
    #allocation10 [shape = 'u8[262144]{0}', space=vmem, size = 0x40000, scoped, tag = 'input window, operand 3, single buffered']
    #allocation11 [shape = 's32[1]{0}', space=sflag, size = 0x4, scoped, tag = 'scoped memory for tpu_custom_call.1']
    #allocation12 [shape = 'u8[8192]{0}', space=vmem, size = 0x2000, scoped, tag = 'output window, operand 0']
    %9 = vsyncpa [#allocation5], 0
    %s10 = scalar_lea.sflag [#allocation5], 1
    %11 = vsyncpa %s10, 0
    %12 = vsyncpa [#allocation8], 0
    %s13 = scalar_lea.sflag [#allocation8], 1
    %14 = vsyncpa %s13, 0
    %15 = vsyncpa [#allocation11], 0
    %16 = vsyncpa [#allocation6], 0
    %s17 = scalar_lea.sflag [#allocation6], 1
    %18 = vsyncpa %s17, 0
    loop: start=0, step=1, limit=4
    $region2: #{tpu_custom_call.1} parent=1 // loop_pre_header
      _
    $region3: #{tpu_custom_call.1} parent=1 // loop_header
      %s20 = sphi 0, %s24
      %p21 = scmp.ge.s32.totalorder %s20, 4
      %s27 = sphi 0, %s39
      %s28 = sphi 0, %s35
      %s29 = sphi 0, %s27
      %s30 = sphi 0, %s28
      %s31 = sphi 0, %s29
      %s32 = sphi 0, %s30
      %s44 = sphi 0, %s46
      %s47 = sphi 0, %s44
      %s48 = sphi 0, %s47
      %s64 = sphi 0, %s48
      %s72 = sphi 0, %s74
      %s75 = sphi 0, %s72
      %s76 = sphi 0, %s75
      %s92 = sphi 0, %s76
      %s100 = sphi 0, %s102
      %s103 = sphi 0, %s100
      %s104 = sphi 0, %s103
      %s120 = sphi 0, %s104
      %s124 = sphi 0, %s124
      %s126 = sphi 0, %s124
      %s127 = sphi 0, %s126
      %s141 = sphi 0, %s127
      %s147 = sphi 0, %s149
      %s150 = sphi 0, %s147
      %s151 = sphi 0, %s150
      %s167 = sphi 0, %s151
    $region4: #{tpu_custom_call.1} parent=1 // loop_header_branch
      %23 = sbr.rel (%p21) target = $region8
    $region5: #{tpu_custom_call.1} parent=1 // loop_body
      %s25 = ssub.s32 %s20, 1
      %s26 = ssub.s32 %s20, 2
      %s33 = sadd.s32 1, %s28
      %p34 = scmp.ge.s32.totalorder %s33, 1
      %s35 = scalar_select %p34, 0, %s33
      %s36 = sadd.s32 1, %s27
      %s37 = scalar_select %p34, %s36, %s27
      %p38 = scmp.ge.s32.totalorder %s37, 2
      %s39 = scalar_select %p38, 0, %s37
      %s40 = sadd.s32 %s27, %s28
      %s41 = sadd.s32 %s39, %s35
      %s42 = ssub.s32 %s40, %s41
      %p43 = scmp.eq.s32.totalorder %s42, 0
      %s45 = sadd.s32 %s44, 1
      %s46 = scalar_select %p43, %s44, %s45
      %p49 = pneg %p43
      %p50 = scmp.eq.s32.totalorder %s20, 1
      %p51 = por %p49, %p50
      %p52 = scmp.ne.s32.totalorder %s44, %s47
      %p53 = scmp.eq.s32.totalorder %s20, 0
      %p54 = por %p52, %p53
      %p55 = scmp.ne.s32.totalorder %s44, %s47
      %p56 = scmp.eq.s32.totalorder %s25, 1
      %p57 = por %p55, %p56
      %p58 = scmp.ne.s32.totalorder %s47, %s48
      %p59 = scmp.eq.s32.totalorder %s25, 0
      %p60 = por %p58, %p59
      %p61 = scmp.ne.s32.totalorder %s47, %s48
      %p62 = scmp.eq.s32.totalorder %s26, 1
      %p63 = por %p61, %p62
      %p65 = scmp.ne.s32.totalorder %s48, %s64
      %p66 = scmp.eq.s32.totalorder %s26, 0
      %p67 = por %p65, %p66
      %s68 = sadd.s32 %s27, %s28
      %s69 = sadd.s32 %s39, %s35
      %s70 = ssub.s32 %s68, %s69
      %p71 = scmp.eq.s32.totalorder %s70, 0
      %s73 = sadd.s32 %s72, 1
      %s74 = scalar_select %p71, %s72, %s73
      %p77 = pneg %p71
      %p78 = scmp.eq.s32.totalorder %s20, 1
      %p79 = por %p77, %p78
      %p80 = scmp.ne.s32.totalorder %s72, %s75
      %p81 = scmp.eq.s32.totalorder %s20, 0
      %p82 = por %p80, %p81
      %p83 = scmp.ne.s32.totalorder %s72, %s75
      %p84 = scmp.eq.s32.totalorder %s25, 1
      %p85 = por %p83, %p84
      %p86 = scmp.ne.s32.totalorder %s75, %s76
      %p87 = scmp.eq.s32.totalorder %s25, 0
      %p88 = por %p86, %p87
      %p89 = scmp.ne.s32.totalorder %s75, %s76
      %p90 = scmp.eq.s32.totalorder %s26, 1
      %p91 = por %p89, %p90
      %p93 = scmp.ne.s32.totalorder %s76, %s92
      %p94 = scmp.eq.s32.totalorder %s26, 0
      %p95 = por %p93, %p94
      %s96 = sadd.s32 %s27, %s28
      %s97 = sadd.s32 %s39, %s35
      %s98 = ssub.s32 %s96, %s97
      %p99 = scmp.eq.s32.totalorder %s98, 0
      %s101 = sadd.s32 %s100, 1
      %s102 = scalar_select %p99, %s100, %s101
      %p105 = pneg %p99
      %p106 = scmp.eq.s32.totalorder %s20, 1
      %p107 = por %p105, %p106
      %p108 = scmp.ne.s32.totalorder %s100, %s103
      %p109 = scmp.eq.s32.totalorder %s20, 0
      %p110 = por %p108, %p109
      %p111 = scmp.ne.s32.totalorder %s100, %s103
      %p112 = scmp.eq.s32.totalorder %s25, 1
      %p113 = por %p111, %p112
      %p114 = scmp.ne.s32.totalorder %s103, %s104
      %p115 = scmp.eq.s32.totalorder %s25, 0
      %p116 = por %p114, %p115
      %p117 = scmp.ne.s32.totalorder %s103, %s104
      %p118 = scmp.eq.s32.totalorder %s26, 1
      %p119 = por %p117, %p118
      %p121 = scmp.ne.s32.totalorder %s104, %s120
      %p122 = scmp.eq.s32.totalorder %s26, 0
      %p123 = por %p121, %p122
      %s125 = sadd.s32 %s124, 1
      %p128 = scmp.eq.s32.totalorder %s20, 1
      %p129 = scmp.ne.s32.totalorder %s124, %s126
      %p130 = scmp.eq.s32.totalorder %s20, 0
      %p131 = por %p129, %p130
      %p132 = scmp.ne.s32.totalorder %s124, %s126
      %p133 = scmp.eq.s32.totalorder %s25, 1
      %p134 = por %p132, %p133
      %p135 = scmp.ne.s32.totalorder %s126, %s127
      %p136 = scmp.eq.s32.totalorder %s25, 0
      %p137 = por %p135, %p136
      %p138 = scmp.ne.s32.totalorder %s126, %s127
      %p139 = scmp.eq.s32.totalorder %s26, 1
      %p140 = por %p138, %p139
      %p142 = scmp.ne.s32.totalorder %s127, %s141
      %p143 = scmp.eq.s32.totalorder %s26, 0
      %p144 = por %p142, %p143
      %s145 = ssub.s32 %s27, %s39
      %p146 = scmp.eq.s32.totalorder %s145, 0
      %s148 = sadd.s32 %s147, 1
      %s149 = scalar_select %p146, %s147, %s148
      %p152 = pneg %p146
      %p153 = scmp.eq.s32.totalorder %s20, 1
      %p154 = por %p152, %p153
      %p155 = scmp.ne.s32.totalorder %s147, %s150
      %p156 = scmp.eq.s32.totalorder %s20, 0
      %p157 = por %p155, %p156
      %p158 = scmp.ne.s32.totalorder %s147, %s150
      %p159 = scmp.eq.s32.totalorder %s25, 1
      %p160 = por %p158, %p159
      %p161 = scmp.ne.s32.totalorder %s150, %s151
      %p162 = scmp.eq.s32.totalorder %s25, 0
      %p163 = por %p161, %p162
      %p164 = scmp.ne.s32.totalorder %s150, %s151
      %p165 = scmp.eq.s32.totalorder %s26, 1
      %p166 = por %p164, %p165
      %p168 = scmp.ne.s32.totalorder %s151, %s167
      %p169 = scmp.eq.s32.totalorder %s26, 0
      %p170 = por %p168, %p169
      %p171 = scmp.le.s32.totalorder 1, %s20
      %p172 = scmp.lt.s32.totalorder %s20, 3
      %p173 = pnand %p171, %p172
      %p174 = pneg %p173
      // Predicated region
      $region9: #{tpu_custom_call.1} parent=5 // pred_check
        _
      $region10: #{tpu_custom_call.1} parent=5 // pred_check_branch
        %176 = sbr.rel (%p173) target = $region12
      $region11: #{tpu_custom_call.1} parent=5 // pred_region
        %s177 = ssub.s32 %s20, 1
        // Predicated region
        $region13: #{tpu_custom_call.1} parent=11 // pred_check
          %p178 = pneg %p137
        $region14: #{tpu_custom_call.1} parent=11 // pred_check_branch
          %180 = sbr.rel (%p178) target = $region16
        $region15: #{tpu_custom_call.1} parent=11 // pred_region
          %s182 = ssub.s32 8192, 8192
          %183 = vsyncadd [#allocation11], %s182
          %s184 = sshll.u32 [#allocation10], 4
          %s185 = int_to_ptr.vmem [resolvable:$true] %s184
          %190 = dma.hbm_to_vmem [thread:$0]  %s3, 8192, %s185, [#allocation11], 4096, 4096, 256
        $region16: #{tpu_custom_call.1} parent=11 // pred_fallthru
          _
      $region12: #{tpu_custom_call.1} parent=5 // pred_fallthru
        _
      %p191 = scmp.lt.s32.totalorder %s20, 2
      // Predicated region
      $region17: #{tpu_custom_call.1} parent=5 // pred_check
        %p192 = pneg %p191
      $region18: #{tpu_custom_call.1} parent=5 // pred_check_branch
        %194 = sbr.rel (%p192) target = $region20
      $region19: #{tpu_custom_call.1} parent=5 // pred_region
        // Predicated region
        $region21: #{tpu_custom_call.1} parent=19 // pred_check
          %p195 = pneg %p54
        $region22: #{tpu_custom_call.1} parent=19 // pred_check_branch
          %197 = sbr.rel (%p195) target = $region24
        $region23: #{tpu_custom_call.1} parent=19 // pred_region
          %s198 = sand.u32 %s44, 1
          %s199 = scalar_lea.sflag [#allocation5], %s198
          %s200 = sand.u32 %s44, 1
          %s201 = smul.addr %s200, 8
          %s202 = scalar_lea.vmem [#allocation4], %s201
          %s203 = sadd.s32 %s27, %s28
          %s205 = ssub.s32 128, 128
          %206 = vsyncadd %s199, %s205
          %s207 = smul.addr %s203, 128
          %s208 = scalar_lea.hbm %s0, %s207
          %s210 = sshll.u32 %s202, 4
          %s211 = int_to_ptr.vmem [resolvable:$true] %s210
          %213 = dma.hbm_to_vmem [thread:$0]  %s208, 128, %s211, %s199
        $region24: #{tpu_custom_call.1} parent=19 // pred_fallthru
          _
        // Predicated region
        $region25: #{tpu_custom_call.1} parent=19 // pred_check
          %p214 = pneg %p82
        $region26: #{tpu_custom_call.1} parent=19 // pred_check_branch
          %216 = sbr.rel (%p214) target = $region28
        $region27: #{tpu_custom_call.1} parent=19 // pred_region
          %s217 = sand.u32 %s20, 1
          %s218 = scalar_lea.sflag [#allocation8], %s217
          %s219 = sand.u32 %s72, 1
          %s220 = smul.addr %s219, 8
          %s221 = scalar_lea.vmem [#allocation7], %s220
          %s222 = sadd.s32 %s27, %s28
          %s224 = ssub.s32 128, 128
          %225 = vsyncadd %s218, %s224
          %s226 = smul.addr %s222, 128
          %s227 = scalar_lea.hbm %s1, %s226
          %s229 = sshll.u32 %s221, 4
          %s230 = int_to_ptr.vmem [resolvable:$true] %s229
          %232 = dma.hbm_to_vmem [thread:$0]  %s227, 128, %s230, %s218
        $region28: #{tpu_custom_call.1} parent=19 // pred_fallthru
          _
        // Predicated region
        $region29: #{tpu_custom_call.1} parent=19 // pred_check
          %p233 = pneg %p110
        $region30: #{tpu_custom_call.1} parent=19 // pred_check_branch
          %235 = sbr.rel (%p233) target = $region32
        $region31: #{tpu_custom_call.1} parent=19 // pred_region
          %s236 = sand.u32 %s20, 1
          %s237 = scalar_lea.sflag [#allocation8], %s236
          %s238 = sand.u32 %s100, 1
          %s239 = smul.addr %s238, 256
          %s240 = scalar_lea.vmem [#allocation9], %s239
          %s241 = sadd.s32 %s27, %s28
          %s243 = ssub.s32 4096, 4096
          %244 = vsyncadd %s237, %s243
          %s245 = smul.addr %s241, 32
          %s246 = smul.addr %s245, 128
          %s247 = scalar_lea.hbm %s2, %s246
          %s249 = sshll.u32 %s240, 4
          %s250 = int_to_ptr.vmem [resolvable:$true] %s249
          %252 = dma.hbm_to_vmem [thread:$0]  %s247, 4096, %s250, %s237
        $region32: #{tpu_custom_call.1} parent=19 // pred_fallthru
          _
      $region20: #{tpu_custom_call.1} parent=5 // pred_fallthru
        _
      %p253 = scmp.le.s32.totalorder 1, %s20
      %p254 = scmp.lt.s32.totalorder %s20, 3
      %p255 = pnand %p253, %p254
      %p256 = pneg %p255
      // Predicated region
      $region33: #{tpu_custom_call.1} parent=5 // pred_check
        _
      $region34: #{tpu_custom_call.1} parent=5 // pred_check_branch
        %258 = sbr.rel (%p255) target = $region36
      $region35: #{tpu_custom_call.1} parent=5 // pred_region
        %s259 = ssub.s32 %s20, 1
        %s260 = sand.u32 %s47, 1
        %s261 = scalar_lea.sflag [#allocation5], %s260
        %s262 = sand.u32 %s47, 1
        %s263 = smul.addr %s262, 8
        %s264 = scalar_lea.vmem [#allocation4], %s263
        // Predicated region
        $region37: #{tpu_custom_call.1} parent=35 // pred_check
          %p265 = pneg %p60
        $region38: #{tpu_custom_call.1} parent=35 // pred_check_branch
          %267 = sbr.rel (%p265) target = $region40
        $region39: #{tpu_custom_call.1} parent=35 // pred_region
          %268 = dma.done %s261, 128
        $region40: #{tpu_custom_call.1} parent=35 // pred_fallthru
          _
        %s269 = sand.u32 %s25, 1
        %s270 = scalar_lea.sflag [#allocation8], %s269
        %s271 = sand.u32 %s75, 1
        %s272 = smul.addr %s271, 8
        %s273 = scalar_lea.vmem [#allocation7], %s272
        // Predicated region
        $region41: #{tpu_custom_call.1} parent=35 // pred_check
          %p274 = pneg %p88
        $region42: #{tpu_custom_call.1} parent=35 // pred_check_branch
          %276 = sbr.rel (%p274) target = $region44
        $region43: #{tpu_custom_call.1} parent=35 // pred_region
          %277 = dma.done %s270, 128
        $region44: #{tpu_custom_call.1} parent=35 // pred_fallthru
          _
        %s278 = sand.u32 %s25, 1
        %s279 = scalar_lea.sflag [#allocation8], %s278
        %s280 = sand.u32 %s103, 1
        %s281 = smul.addr %s280, 256
        %s282 = scalar_lea.vmem [#allocation9], %s281
        // Predicated region
        $region45: #{tpu_custom_call.1} parent=35 // pred_check
          %p283 = pneg %p116
        $region46: #{tpu_custom_call.1} parent=35 // pred_check_branch
          %285 = sbr.rel (%p283) target = $region48
        $region47: #{tpu_custom_call.1} parent=35 // pred_region
          %286 = dma.done %s279, 4096
        $region48: #{tpu_custom_call.1} parent=35 // pred_fallthru
          _
        // Predicated region
        $region49: #{tpu_custom_call.1} parent=35 // pred_check
          %p287 = pneg %p137
        $region50: #{tpu_custom_call.1} parent=35 // pred_check_branch
          %289 = sbr.rel (%p287) target = $region52
        $region51: #{tpu_custom_call.1} parent=35 // pred_region
          %290 = dma.done [#allocation11], 8192
        $region52: #{tpu_custom_call.1} parent=35 // pred_fallthru
          _
        %s291 = sand.u32 %s47, 1
        %s292 = scalar_lea.sflag [#allocation5], %s291
        %s293 = sand.u32 %s47, 1
        %s294 = smul.addr %s293, 8
        %s295 = scalar_lea.vmem [#allocation4], %s294
        %p296 = pneg %p60
        %p297 = pneg %p57
        %s298 = sand.u32 %s25, 1
        %s299 = scalar_lea.sflag [#allocation8], %s298
        %s300 = sand.u32 %s75, 1
        %s301 = smul.addr %s300, 8
        %s302 = scalar_lea.vmem [#allocation7], %s301
        %p303 = pneg %p88
        %p304 = pneg %p85
        %s305 = sand.u32 %s25, 1
        %s306 = scalar_lea.sflag [#allocation8], %s305
        %s307 = sand.u32 %s103, 1
        %s308 = smul.addr %s307, 256
        %s309 = scalar_lea.vmem [#allocation9], %s308
        %p310 = pneg %p116
        %p311 = pneg %p113
        %p312 = pneg %p137
        %p313 = pneg %p134
        %p314 = pneg %p163
        %p315 = pneg %p160
        %s316 = sand.u32 %s150, 1
        %s317 = scalar_lea.sflag [#allocation6], %s316
        %s318 = sand.u32 %s150, 1
        %s319 = smul.addr %s318, 8
        %s320 = scalar_lea.vmem [#allocation12], %s319
        %s321 = sadd.s32 %s29, %s30
        %s322 = sadd.s32 %s29, %s30
        %s323 = sadd.s32 %s29, %s30
        %p324 = scmp.eq.s32.totalorder %s30, 0
        // Predicated region
        $region53: #{tpu_custom_call.1} parent=35 // pred_check
          %p325 = pneg %p324
        $region54: #{tpu_custom_call.1} parent=35 // pred_check_branch
          %327 = sbr.rel (%p325) target = $region56
        $region55: #{tpu_custom_call.1} parent=35 // pred_region
          %vm328 = vcmask 0
          %329 = vst.msk [vmem:[#allocation2] sm:$0x1] %vm328, 0.0
          %330 = vst.msk [vmem:[#allocation3] sm:$0x1] %vm328, 0.0
        $region56: #{tpu_custom_call.1} parent=35 // pred_fallthru
          _
        %s331 = sadd.s32 %s29, %s30
        %s332 = smul.u32 %s331, 8
        %v333 = vlaneseq
        %v334 = vshrl.u32 %v333, 7
        %v335 = vstv %s332
        %v336 = vadd.s32 %v335, %v334
        %vm337 = vcmp.lt.s32.totalorder %v336, 8
        %v338 = vsel %vm337, 1, 0
        %v339 = vcvt.s32.f32 %v338
        %v340 = vld [vmem:[%s264] sm:$0xff]
        %v341 = vld [vmem:[%s273] sm:$0xff]
        %v342 = vld [vmem:[%s282] sm:$0xff]
        %v343 = vld [vmem:[%s282 + $0x8] sm:$0xff]
        %v344 = vld [vmem:[%s282 + $0x10] sm:$0xff]
        %v345 = vld [vmem:[%s282 + $0x18] sm:$0xff]
        %v346 = vld [vmem:[%s282 + $0x20] sm:$0xff]
        %v347 = vld [vmem:[%s282 + $0x28] sm:$0xff]
        %v348 = vld [vmem:[%s282 + $0x30] sm:$0xff]
        %v349 = vld [vmem:[%s282 + $0x38] sm:$0xff]
        %v350 = vld [vmem:[%s282 + $0x40] sm:$0xff]
        %v351 = vld [vmem:[%s282 + $0x48] sm:$0xff]
        %v352 = vld [vmem:[%s282 + $0x50] sm:$0xff]
        %v353 = vld [vmem:[%s282 + $0x58] sm:$0xff]
        %v354 = vld [vmem:[%s282 + $0x60] sm:$0xff]
        %v355 = vld [vmem:[%s282 + $0x68] sm:$0xff]
        %v356 = vld [vmem:[%s282 + $0x70] sm:$0xff]
        %v357 = vld [vmem:[%s282 + $0x78] sm:$0xff]
        %v358 = vld [vmem:[%s282 + $0x80] sm:$0xff]
        %v359 = vld [vmem:[%s282 + $0x88] sm:$0xff]
        %v360 = vld [vmem:[%s282 + $0x90] sm:$0xff]
        %v361 = vld [vmem:[%s282 + $0x98] sm:$0xff]
        %v362 = vld [vmem:[%s282 + $0xa0] sm:$0xff]
        %v363 = vld [vmem:[%s282 + $0xa8] sm:$0xff]
        %v364 = vld [vmem:[%s282 + $0xb0] sm:$0xff]
        %v365 = vld [vmem:[%s282 + $0xb8] sm:$0xff]
        %v366 = vld [vmem:[%s282 + $0xc0] sm:$0xff]
        %v367 = vld [vmem:[%s282 + $0xc8] sm:$0xff]
        %v368 = vld [vmem:[%s282 + $0xd0] sm:$0xff]
        %v369 = vld [vmem:[%s282 + $0xd8] sm:$0xff]
        %v370 = vld [vmem:[%s282 + $0xe0] sm:$0xff]
        %v371 = vld [vmem:[%s282 + $0xe8] sm:$0xff]
        %v372 = vld [vmem:[%s282 + $0xf0] sm:$0xff]
        %v373 = vld [vmem:[%s282 + $0xf8] sm:$0xff]
        %v374 = vld [vmem:[#allocation10] sm:$0xff]
        %v375 = vld [vmem:[#allocation10 + $0x8] sm:$0xff]
        %v376 = vld [vmem:[#allocation10 + $0x10] sm:$0xff]
        %v377 = vld [vmem:[#allocation10 + $0x18] sm:$0xff]
        %v378 = vld [vmem:[#allocation10 + $0x20] sm:$0xff]
        %v379 = vld [vmem:[#allocation10 + $0x28] sm:$0xff]
        %v380 = vld [vmem:[#allocation10 + $0x30] sm:$0xff]
        %v381 = vld [vmem:[#allocation10 + $0x38] sm:$0xff]
        %v382 = vld [vmem:[#allocation10 + $0x40] sm:$0xff]
        %v383 = vld [vmem:[#allocation10 + $0x48] sm:$0xff]
        %v384 = vld [vmem:[#allocation10 + $0x50] sm:$0xff]
        %v385 = vld [vmem:[#allocation10 + $0x58] sm:$0xff]
        %v386 = vld [vmem:[#allocation10 + $0x60] sm:$0xff]
        %v387 = vld [vmem:[#allocation10 + $0x68] sm:$0xff]
        %v388 = vld [vmem:[#allocation10 + $0x70] sm:$0xff]
        %v389 = vld [vmem:[#allocation10 + $0x78] sm:$0xff]
        %v390 = vld [vmem:[#allocation10 + $0x80] sm:$0xff]
        %v391 = vld [vmem:[#allocation10 + $0x88] sm:$0xff]
        %v392 = vld [vmem:[#allocation10 + $0x90] sm:$0xff]
        %v393 = vld [vmem:[#allocation10 + $0x98] sm:$0xff]
        %v394 = vld [vmem:[#allocation10 + $0xa0] sm:$0xff]
        %v395 = vld [vmem:[#allocation10 + $0xa8] sm:$0xff]
        %v396 = vld [vmem:[#allocation10 + $0xb0] sm:$0xff]
        %v397 = vld [vmem:[#allocation10 + $0xb8] sm:$0xff]
        %v398 = vld [vmem:[#allocation10 + $0xc0] sm:$0xff]
        %v399 = vld [vmem:[#allocation10 + $0xc8] sm:$0xff]
        %v400 = vld [vmem:[#allocation10 + $0xd0] sm:$0xff]
        %v401 = vld [vmem:[#allocation10 + $0xd8] sm:$0xff]
        %v402 = vld [vmem:[#allocation10 + $0xe0] sm:$0xff]
        %v403 = vld [vmem:[#allocation10 + $0xe8] sm:$0xff]
        %v404 = vld [vmem:[#allocation10 + $0xf0] sm:$0xff]
        %v405 = vld [vmem:[#allocation10 + $0xf8] sm:$0xff]
        %v406 = vld [vmem:[#allocation10 + $0x100] sm:$0xff]
        %v407 = vld [vmem:[#allocation10 + $0x108] sm:$0xff]
        %v408 = vld [vmem:[#allocation10 + $0x110] sm:$0xff]
        %v409 = vld [vmem:[#allocation10 + $0x118] sm:$0xff]
        %v410 = vld [vmem:[#allocation10 + $0x120] sm:$0xff]
        %v411 = vld [vmem:[#allocation10 + $0x128] sm:$0xff]
        %v412 = vld [vmem:[#allocation10 + $0x130] sm:$0xff]
        %v413 = vld [vmem:[#allocation10 + $0x138] sm:$0xff]
        %v414 = vld [vmem:[#allocation10 + $0x140] sm:$0xff]
        %v415 = vld [vmem:[#allocation10 + $0x148] sm:$0xff]
        %v416 = vld [vmem:[#allocation10 + $0x150] sm:$0xff]
        %v417 = vld [vmem:[#allocation10 + $0x158] sm:$0xff]
        %v418 = vld [vmem:[#allocation10 + $0x160] sm:$0xff]
        %v419 = vld [vmem:[#allocation10 + $0x168] sm:$0xff]
        %v420 = vld [vmem:[#allocation10 + $0x170] sm:$0xff]
        %v421 = vld [vmem:[#allocation10 + $0x178] sm:$0xff]
        %v422 = vld [vmem:[#allocation10 + $0x180] sm:$0xff]
        %v423 = vld [vmem:[#allocation10 + $0x188] sm:$0xff]
        %v424 = vld [vmem:[#allocation10 + $0x190] sm:$0xff]
        %v425 = vld [vmem:[#allocation10 + $0x198] sm:$0xff]
        %v426 = vld [vmem:[#allocation10 + $0x1a0] sm:$0xff]
        %v427 = vld [vmem:[#allocation10 + $0x1a8] sm:$0xff]
        %v428 = vld [vmem:[#allocation10 + $0x1b0] sm:$0xff]
        %v429 = vld [vmem:[#allocation10 + $0x1b8] sm:$0xff]
        %v430 = vld [vmem:[#allocation10 + $0x1c0] sm:$0xff]
        %v431 = vld [vmem:[#allocation10 + $0x1c8] sm:$0xff]
        %v432 = vld [vmem:[#allocation10 + $0x1d0] sm:$0xff]
        %v433 = vld [vmem:[#allocation10 + $0x1d8] sm:$0xff]
        %v434 = vld [vmem:[#allocation10 + $0x1e0] sm:$0xff]
        %v435 = vld [vmem:[#allocation10 + $0x1e8] sm:$0xff]
        %v436 = vld [vmem:[#allocation10 + $0x1f0] sm:$0xff]
        %v437 = vld [vmem:[#allocation10 + $0x1f8] sm:$0xff]
        %v438 = vlaneseq
        %v439 = vand.u32 %v438, 127
        %440 = vset.pattern.permute.xlu0 0
        %441 = vperm.xlu0 %440, %v340
        %v442 = vpop.permute.xlu0 %441
        %vm443 = vcmp.eq.s32.totalorder %v439, %v442
        %v444 = vsel %vm443, 1, 0
        %v445 = vcvt.s32.f32 %v444
        %vm446 = vcmask 130048
        %v447 = vsel %vm446, %v341, -inf
        %448 = vmax.xlane.f32.xlu0 %v447
        %v449 = vpop.xlane.xlu0 %448
        %v450 = vsub.f32 %v341, %v449
        %v451 = vmul.f32 %v450, 1.442695
        %v452 = vpow.pop %v451
        %v453 = vsel %vm446, %v452, 0.0
        %454 = vadd.xlane.f32.xlu0 %v453
        %v455 = vpop.xlane.xlu0 %454
        %v456 = vlog2.pop %v455
        %v457 = vmul.f32 %v456, 0.6931472
        %v458 = vadd.f32 %v449, %v457
        %v459 = vmul.f32 %v341, %v445
        %v460 = vsel %vm446, %v459, 0.0
        %461 = vadd.xlane.f32.xlu0 %v460
        %v462 = vpop.xlane.xlu0 %461
        %v463 = vsub.f32 %v458, %v462
        %v464 = vmul.f32 %v463, %v339
        %v465 = vld [vmem:[#allocation2] sm:$0x1]
        %v466 = vrot.slane %v464, 4
        %v467 = vadd.f32 %v464, %v466
        %v468 = vrot.slane %v467, 2
        %v469 = vadd.f32 %v467, %v468
        %v470 = vrot.slane %v469, 1
        %v471 = vadd.f32 %v469, %v470
        %v472 = vadd.f32 %v465, %v471
        %vm473 = vcmask 0
        %474 = vst.msk [vmem:[#allocation2] sm:$0x1] %vm473, %v472
        %v475 = vmax.f32 %v342, 0.0
        %v476 = vmax.f32 %v343, 0.0
        %v477 = vmax.f32 %v344, 0.0
        %v478 = vmax.f32 %v345, 0.0
        %v479 = vmax.f32 %v346, 0.0
        %v480 = vmax.f32 %v347, 0.0
        %v481 = vmax.f32 %v348, 0.0
        %v482 = vmax.f32 %v349, 0.0
        %v483 = vmax.f32 %v350, 0.0
        %v484 = vmax.f32 %v351, 0.0
        %v485 = vmax.f32 %v352, 0.0
        %v486 = vmax.f32 %v353, 0.0
        %v487 = vmax.f32 %v354, 0.0
        %v488 = vmax.f32 %v355, 0.0
        %v489 = vmax.f32 %v356, 0.0
        %v490 = vmax.f32 %v357, 0.0
        %v491 = vmax.f32 %v358, 0.0
        %v492 = vmax.f32 %v359, 0.0
        %v493 = vmax.f32 %v360, 0.0
        %v494 = vmax.f32 %v361, 0.0
        %v495 = vmax.f32 %v362, 0.0
        %v496 = vmax.f32 %v363, 0.0
        %v497 = vmax.f32 %v364, 0.0
        %v498 = vmax.f32 %v365, 0.0
        %v499 = vmax.f32 %v366, 0.0
        %v500 = vmax.f32 %v367, 0.0
        %v501 = vmax.f32 %v368, 0.0
        %v502 = vmax.f32 %v369, 0.0
        %v503 = vmax.f32 %v370, 0.0
        %v504 = vmax.f32 %v371, 0.0
        %v505 = vmax.f32 %v372, 0.0
        %v506 = vmax.f32 %v373, 0.0
        %v507 = vand.u32 2147483647, %v342
        %v508 = vand.u32 2147483647, %v343
        %v509 = vand.u32 2147483647, %v344
        %v510 = vand.u32 2147483647, %v345
        %v511 = vand.u32 2147483647, %v346
        %v512 = vand.u32 2147483647, %v347
        %v513 = vand.u32 2147483647, %v348
        %v514 = vand.u32 2147483647, %v349
        %v515 = vand.u32 2147483647, %v350
        %v516 = vand.u32 2147483647, %v351
        %v517 = vand.u32 2147483647, %v352
        %v518 = vand.u32 2147483647, %v353
        %v519 = vand.u32 2147483647, %v354
        %v520 = vand.u32 2147483647, %v355
        %v521 = vand.u32 2147483647, %v356
        %v522 = vand.u32 2147483647, %v357
        %v523 = vand.u32 2147483647, %v358
        %v524 = vand.u32 2147483647, %v359
        %v525 = vand.u32 2147483647, %v360
        %v526 = vand.u32 2147483647, %v361
        %v527 = vand.u32 2147483647, %v362
        %v528 = vand.u32 2147483647, %v363
        %v529 = vand.u32 2147483647, %v364
        %v530 = vand.u32 2147483647, %v365
        %v531 = vand.u32 2147483647, %v366
        %v532 = vand.u32 2147483647, %v367
        %v533 = vand.u32 2147483647, %v368
        %v534 = vand.u32 2147483647, %v369
        %v535 = vand.u32 2147483647, %v370
        %v536 = vand.u32 2147483647, %v371
        %v537 = vand.u32 2147483647, %v372
        %v538 = vand.u32 2147483647, %v373
        %v539 = vsub.f32 0.0, %v507
        %v540 = vsub.f32 0.0, %v508
        %v541 = vsub.f32 0.0, %v509
        %v542 = vsub.f32 0.0, %v510
        %v543 = vsub.f32 0.0, %v511
        %v544 = vsub.f32 0.0, %v512
        %v545 = vsub.f32 0.0, %v513
        %v546 = vsub.f32 0.0, %v514
        %v547 = vsub.f32 0.0, %v515
        %v548 = vsub.f32 0.0, %v516
        %v549 = vsub.f32 0.0, %v517
        %v550 = vsub.f32 0.0, %v518
        %v551 = vsub.f32 0.0, %v519
        %v552 = vsub.f32 0.0, %v520
        %v553 = vsub.f32 0.0, %v521
        %v554 = vsub.f32 0.0, %v522
        %v555 = vsub.f32 0.0, %v523
        %v556 = vsub.f32 0.0, %v524
        %v557 = vsub.f32 0.0, %v525
        %v558 = vsub.f32 0.0, %v526
        %v559 = vsub.f32 0.0, %v527
        %v560 = vsub.f32 0.0, %v528
        %v561 = vsub.f32 0.0, %v529
        %v562 = vsub.f32 0.0, %v530
        %v563 = vsub.f32 0.0, %v531
        %v564 = vsub.f32 0.0, %v532
        %v565 = vsub.f32 0.0, %v533
        %v566 = vsub.f32 0.0, %v534
        %v567 = vsub.f32 0.0, %v535
        %v568 = vsub.f32 0.0, %v536
        %v569 = vsub.f32 0.0, %v537
        %v570 = vsub.f32 0.0, %v538
        %v571 = vmul.f32 %v539, 1.442695
        %v572 = vpow.pop %v571
        %v573 = vmul.f32 %v540, 1.442695
        %v574 = vpow.pop %v573
        %v575 = vmul.f32 %v541, 1.442695
        %v576 = vpow.pop %v575
        %v577 = vmul.f32 %v542, 1.442695
        %v578 = vpow.pop %v577
        %v579 = vmul.f32 %v543, 1.442695
        %v580 = vpow.pop %v579
        %v581 = vmul.f32 %v544, 1.442695
        %v582 = vpow.pop %v581
        %v583 = vmul.f32 %v545, 1.442695
        %v584 = vpow.pop %v583
        %v585 = vmul.f32 %v546, 1.442695
        %v586 = vpow.pop %v585
        %v587 = vmul.f32 %v547, 1.442695
        %v588 = vpow.pop %v587
        %v589 = vmul.f32 %v548, 1.442695
        %v590 = vpow.pop %v589
        %v591 = vmul.f32 %v549, 1.442695
        %v592 = vpow.pop %v591
        %v593 = vmul.f32 %v550, 1.442695
        %v594 = vpow.pop %v593
        %v595 = vmul.f32 %v551, 1.442695
        %v596 = vpow.pop %v595
        %v597 = vmul.f32 %v552, 1.442695
        %v598 = vpow.pop %v597
        %v599 = vmul.f32 %v553, 1.442695
        %v600 = vpow.pop %v599
        %v601 = vmul.f32 %v554, 1.442695
        %v602 = vpow.pop %v601
        %v603 = vmul.f32 %v555, 1.442695
        %v604 = vpow.pop %v603
        %v605 = vmul.f32 %v556, 1.442695
        %v606 = vpow.pop %v605
        %v607 = vmul.f32 %v557, 1.442695
        %v608 = vpow.pop %v607
        %v609 = vmul.f32 %v558, 1.442695
        %v610 = vpow.pop %v609
        %v611 = vmul.f32 %v559, 1.442695
        %v612 = vpow.pop %v611
        %v613 = vmul.f32 %v560, 1.442695
        %v614 = vpow.pop %v613
        %v615 = vmul.f32 %v561, 1.442695
        %v616 = vpow.pop %v615
        %v617 = vmul.f32 %v562, 1.442695
        %v618 = vpow.pop %v617
        %v619 = vmul.f32 %v563, 1.442695
        %v620 = vpow.pop %v619
        %v621 = vmul.f32 %v564, 1.442695
        %v622 = vpow.pop %v621
        %v623 = vmul.f32 %v565, 1.442695
        %v624 = vpow.pop %v623
        %v625 = vmul.f32 %v566, 1.442695
        %v626 = vpow.pop %v625
        %v627 = vmul.f32 %v567, 1.442695
        %v628 = vpow.pop %v627
        %v629 = vmul.f32 %v568, 1.442695
        %v630 = vpow.pop %v629
        %v631 = vmul.f32 %v569, 1.442695
        %v632 = vpow.pop %v631
        %v633 = vmul.f32 %v570, 1.442695
        %v634 = vpow.pop %v633
        %v635 = vadd.f32 %v572, 1.0
        %v636 = vadd.f32 %v574, 1.0
        %v637 = vadd.f32 %v576, 1.0
        %v638 = vadd.f32 %v578, 1.0
        %v639 = vadd.f32 %v580, 1.0
        %v640 = vadd.f32 %v582, 1.0
        %v641 = vadd.f32 %v584, 1.0
        %v642 = vadd.f32 %v586, 1.0
        %v643 = vadd.f32 %v588, 1.0
        %v644 = vadd.f32 %v590, 1.0
        %v645 = vadd.f32 %v592, 1.0
        %v646 = vadd.f32 %v594, 1.0
        %v647 = vadd.f32 %v596, 1.0
        %v648 = vadd.f32 %v598, 1.0
        %v649 = vadd.f32 %v600, 1.0
        %v650 = vadd.f32 %v602, 1.0
        %v651 = vadd.f32 %v604, 1.0
        %v652 = vadd.f32 %v606, 1.0
        %v653 = vadd.f32 %v608, 1.0
        %v654 = vadd.f32 %v610, 1.0
        %v655 = vadd.f32 %v612, 1.0
        %v656 = vadd.f32 %v614, 1.0
        %v657 = vadd.f32 %v616, 1.0
        %v658 = vadd.f32 %v618, 1.0
        %v659 = vadd.f32 %v620, 1.0
        %v660 = vadd.f32 %v622, 1.0
        %v661 = vadd.f32 %v624, 1.0
        %v662 = vadd.f32 %v626, 1.0
        %v663 = vadd.f32 %v628, 1.0
        %v664 = vadd.f32 %v630, 1.0
        %v665 = vadd.f32 %v632, 1.0
        %v666 = vadd.f32 %v634, 1.0
        %v667 = vlog2.pop %v635
        %v668 = vmul.f32 %v667, 0.6931472
        %v669 = vlog2.pop %v636
        %v670 = vmul.f32 %v669, 0.6931472
        %v671 = vlog2.pop %v637
        %v672 = vmul.f32 %v671, 0.6931472
        %v673 = vlog2.pop %v638
        %v674 = vmul.f32 %v673, 0.6931472
        %v675 = vlog2.pop %v639
        %v676 = vmul.f32 %v675, 0.6931472
        %v677 = vlog2.pop %v640
        %v678 = vmul.f32 %v677, 0.6931472
        %v679 = vlog2.pop %v641
        %v680 = vmul.f32 %v679, 0.6931472
        %v681 = vlog2.pop %v642
        %v682 = vmul.f32 %v681, 0.6931472
        %v683 = vlog2.pop %v643
        %v684 = vmul.f32 %v683, 0.6931472
        %v685 = vlog2.pop %v644
        %v686 = vmul.f32 %v685, 0.6931472
        %v687 = vlog2.pop %v645
        %v688 = vmul.f32 %v687, 0.6931472
        %v689 = vlog2.pop %v646
        %v690 = vmul.f32 %v689, 0.6931472
        %v691 = vlog2.pop %v647
        %v692 = vmul.f32 %v691, 0.6931472
        %v693 = vlog2.pop %v648
        %v694 = vmul.f32 %v693, 0.6931472
        %v695 = vlog2.pop %v649
        %v696 = vmul.f32 %v695, 0.6931472
        %v697 = vlog2.pop %v650
        %v698 = vmul.f32 %v697, 0.6931472
        %v699 = vlog2.pop %v651
        %v700 = vmul.f32 %v699, 0.6931472
        %v701 = vlog2.pop %v652
        %v702 = vmul.f32 %v701, 0.6931472
        %v703 = vlog2.pop %v653
        %v704 = vmul.f32 %v703, 0.6931472
        %v705 = vlog2.pop %v654
        %v706 = vmul.f32 %v705, 0.6931472
        %v707 = vlog2.pop %v655
        %v708 = vmul.f32 %v707, 0.6931472
        %v709 = vlog2.pop %v656
        %v710 = vmul.f32 %v709, 0.6931472
        %v711 = vlog2.pop %v657
        %v712 = vmul.f32 %v711, 0.6931472
        %v713 = vlog2.pop %v658
        %v714 = vmul.f32 %v713, 0.6931472
        %v715 = vlog2.pop %v659
        %v716 = vmul.f32 %v715, 0.6931472
        %v717 = vlog2.pop %v660
        %v718 = vmul.f32 %v717, 0.6931472
        %v719 = vlog2.pop %v661
        %v720 = vmul.f32 %v719, 0.6931472
        %v721 = vlog2.pop %v662
        %v722 = vmul.f32 %v721, 0.6931472
        %v723 = vlog2.pop %v663
        %v724 = vmul.f32 %v723, 0.6931472
        %v725 = vlog2.pop %v664
        %v726 = vmul.f32 %v725, 0.6931472
        %v727 = vlog2.pop %v665
        %v728 = vmul.f32 %v727, 0.6931472
        %v729 = vlog2.pop %v666
        %v730 = vmul.f32 %v729, 0.6931472
        %v731 = vadd.f32 %v475, %v668
        %v732 = vadd.f32 %v476, %v670
        %v733 = vadd.f32 %v477, %v672
        %v734 = vadd.f32 %v478, %v674
        %v735 = vadd.f32 %v479, %v676
        %v736 = vadd.f32 %v480, %v678
        %v737 = vadd.f32 %v481, %v680
        %v738 = vadd.f32 %v482, %v682
        %v739 = vadd.f32 %v483, %v684
        %v740 = vadd.f32 %v484, %v686
        %v741 = vadd.f32 %v485, %v688
        %v742 = vadd.f32 %v486, %v690
        %v743 = vadd.f32 %v487, %v692
        %v744 = vadd.f32 %v488, %v694
        %v745 = vadd.f32 %v489, %v696
        %v746 = vadd.f32 %v490, %v698
        %v747 = vadd.f32 %v491, %v700
        %v748 = vadd.f32 %v492, %v702
        %v749 = vadd.f32 %v493, %v704
        %v750 = vadd.f32 %v494, %v706
        %v751 = vadd.f32 %v495, %v708
        %v752 = vadd.f32 %v496, %v710
        %v753 = vadd.f32 %v497, %v712
        %v754 = vadd.f32 %v498, %v714
        %v755 = vadd.f32 %v499, %v716
        %v756 = vadd.f32 %v500, %v718
        %v757 = vadd.f32 %v501, %v720
        %v758 = vadd.f32 %v502, %v722
        %v759 = vadd.f32 %v503, %v724
        %v760 = vadd.f32 %v504, %v726
        %v761 = vadd.f32 %v505, %v728
        %v762 = vadd.f32 %v506, %v730
        %v763 = vadd.f32 %v731, %v732
        %v764 = vadd.f32 %v763, %v733
        %v765 = vadd.f32 %v764, %v734
        %v766 = vadd.f32 %v765, %v735
        %v767 = vadd.f32 %v766, %v736
        %v768 = vadd.f32 %v767, %v737
        %v769 = vadd.f32 %v768, %v738
        %v770 = vadd.f32 %v769, %v739
        %v771 = vadd.f32 %v770, %v740
        %v772 = vadd.f32 %v771, %v741
        %v773 = vadd.f32 %v772, %v742
        %v774 = vadd.f32 %v773, %v743
        %v775 = vadd.f32 %v774, %v744
        %v776 = vadd.f32 %v775, %v745
        %v777 = vadd.f32 %v776, %v746
        %v778 = vadd.f32 %v777, %v747
        %v779 = vadd.f32 %v778, %v748
        %v780 = vadd.f32 %v779, %v749
        %v781 = vadd.f32 %v780, %v750
        %v782 = vadd.f32 %v781, %v751
        %v783 = vadd.f32 %v782, %v752
        %v784 = vadd.f32 %v783, %v753
        %v785 = vadd.f32 %v784, %v754
        %v786 = vadd.f32 %v785, %v755
        %v787 = vadd.f32 %v786, %v756
        %v788 = vadd.f32 %v787, %v757
        %v789 = vadd.f32 %v788, %v758
        %v790 = vadd.f32 %v789, %v759
        %v791 = vadd.f32 %v790, %v760
        %v792 = vadd.f32 %v791, %v761
        %v793 = vadd.f32 %v792, %v762
        %794 = vadd.xlane.f32.xlu0 %v793
        %v795 = vpop.xlane.xlu0 %794
        %v796 = vmul.f32 %v795, %v339
        %797 = vmatprep.subr.mxu0 %v375
        %798 = vmatpush1.xpose.msra.mxu0 %v374
        %799 = vmatprep.subr.mxu0 %v407
        %800 = vmatpush1.xpose.msra.mxu0 %v406
        %801 = vmatprep.subr.mxu0 0.0
        %802 = vmatpush1.xpose.msra.mxu0 0.0
        %803 = vmatprep.subr.mxu0 0.0
        %804 = vmatpush1.xpose.msra.mxu0 0.0
        %805 = vmatprep.subr.mxu0 0.0
        %806 = vmatpush1.xpose.msra.mxu0 0.0
        %807 = vmatprep.subr.mxu0 0.0
        %808 = vmatpush1.xpose.msra.mxu0 0.0
        %809 = vmatprep.subr.mxu0 0.0
        %810 = vmatpush1.xpose.msra.mxu0 0.0
        %811 = vmatprep.subr.mxu0 0.0
        %812 = vmatpush1.xpose.msra.mxu0 0.0
        %813 = vmatprep.subr.mxu0 0.0
        %814 = vmatpush1.xpose.msra.mxu0 0.0
        %815 = vmatprep.subr.mxu0 0.0
        %816 = vmatpush1.xpose.msra.mxu0 0.0
        %817 = vmatprep.subr.mxu0 0.0
        %818 = vmatpush1.xpose.msra.mxu0 0.0
        %819 = vmatprep.subr.mxu0 0.0
        %820 = vmatpush1.xpose.msra.mxu0 0.0
        %821 = vmatprep.subr.mxu0 0.0
        %822 = vmatpush1.xpose.msra.mxu0 0.0
        %823 = vmatprep.subr.mxu0 0.0
        %824 = vmatpush1.xpose.msra.mxu0 0.0
        %825 = vmatprep.subr.mxu0 0.0
        %826 = vmatpush1.xpose.msra.mxu0 0.0
        %827 = vmatprep.subr.mxu0 0.0
        %828 = vmatpush1.xpose.msra.mxu0 0.0
        %829 = vmatprep.subr.mxu0 0.0
        %830 = vmatpush1.xpose.msra.mxu0 0.0
        %831 = vmatprep.subr.mxu0 0.0
        %832 = vmatpush1.xpose.msra.mxu0 0.0
        %833 = vmatprep.subr.mxu0 0.0
        %834 = vmatpush1.xpose.msra.mxu0 0.0
        %835 = vmatprep.subr.mxu0 0.0
        %836 = vmatpush1.xpose.msra.mxu0 0.0
        %837 = vmatprep.subr.mxu0 0.0
        %838 = vmatpush1.xpose.msra.mxu0 0.0
        %839 = vmatprep.subr.mxu0 0.0
        %840 = vmatpush1.xpose.msra.mxu0 0.0
        %841 = vmatprep.subr.mxu0 0.0
        %842 = vmatpush1.xpose.msra.mxu0 0.0
        %843 = vmatprep.subr.mxu0 0.0
        %844 = vmatpush1.xpose.msra.mxu0 0.0
        %845 = vmatprep.subr.mxu0 0.0
        %846 = vmatpush1.xpose.msra.mxu0 0.0
        %847 = vmatprep.subr.mxu0 0.0
        %848 = vmatpush1.xpose.msra.mxu0 0.0
        %849 = vmatprep.subr.mxu0 0.0
        %850 = vmatpush1.xpose.msra.mxu0 0.0
        %851 = vmatprep.subr.mxu0 0.0
        %852 = vmatpush1.xpose.msra.mxu0 0.0
        %853 = vmatprep.subr.mxu0 0.0
        %854 = vmatpush1.xpose.msra.mxu0 0.0
        %855 = vmatprep.subr.mxu0 0.0
        %856 = vmatpush1.xpose.msra.mxu0 0.0
        %857 = vmatprep.subr.mxu0 0.0
        %858 = vmatpush1.xpose.msra.mxu0 0.0
        %859 = vmatprep.subr.mxu0 0.0
        %860 = vmatpush1.xpose.msra.mxu0 0.0
        %861 = vmatprep.mubr.f32.mxu0 %v343
        %862 = vmatmul.mubr.f32.gmra.mrb[0].mxu0 %v342
        %v863 = vpop.f32.mrb[0].mxu0
        %v864 = vadd.f32 0.0, %v863
        %v865 = vpop.f32.mrb[0].mxu0
        %866 = vdwg.mxu0
        %867 = vmatprep.subr.mxu0 %v377
        %868 = vmatpush1.xpose.msra.mxu0 %v376
        %869 = vmatprep.subr.mxu0 %v409
        %870 = vmatpush1.xpose.msra.mxu0 %v408
        %871 = vmatprep.subr.mxu0 0.0
        %872 = vmatpush1.xpose.msra.mxu0 0.0
        %873 = vmatprep.subr.mxu0 0.0
        %874 = vmatpush1.xpose.msra.mxu0 0.0
        %875 = vmatprep.subr.mxu0 0.0
        %876 = vmatpush1.xpose.msra.mxu0 0.0
        %877 = vmatprep.subr.mxu0 0.0
        %878 = vmatpush1.xpose.msra.mxu0 0.0
        %879 = vmatprep.subr.mxu0 0.0
        %880 = vmatpush1.xpose.msra.mxu0 0.0
        %881 = vmatprep.subr.mxu0 0.0
        %882 = vmatpush1.xpose.msra.mxu0 0.0
        %883 = vmatprep.subr.mxu0 0.0
        %884 = vmatpush1.xpose.msra.mxu0 0.0
        %885 = vmatprep.subr.mxu0 0.0
        %886 = vmatpush1.xpose.msra.mxu0 0.0
        %887 = vmatprep.subr.mxu0 0.0
        %888 = vmatpush1.xpose.msra.mxu0 0.0
        %889 = vmatprep.subr.mxu0 0.0
        %890 = vmatpush1.xpose.msra.mxu0 0.0
        %891 = vmatprep.subr.mxu0 0.0
        %892 = vmatpush1.xpose.msra.mxu0 0.0
        %893 = vmatprep.subr.mxu0 0.0
        %894 = vmatpush1.xpose.msra.mxu0 0.0
        %895 = vmatprep.subr.mxu0 0.0
        %896 = vmatpush1.xpose.msra.mxu0 0.0
        %897 = vmatprep.subr.mxu0 0.0
        %898 = vmatpush1.xpose.msra.mxu0 0.0
        %899 = vmatprep.subr.mxu0 0.0
        %900 = vmatpush1.xpose.msra.mxu0 0.0
        %901 = vmatprep.subr.mxu0 0.0
        %902 = vmatpush1.xpose.msra.mxu0 0.0
        %903 = vmatprep.subr.mxu0 0.0
        %904 = vmatpush1.xpose.msra.mxu0 0.0
        %905 = vmatprep.subr.mxu0 0.0
        %906 = vmatpush1.xpose.msra.mxu0 0.0
        %907 = vmatprep.subr.mxu0 0.0
        %908 = vmatpush1.xpose.msra.mxu0 0.0
        %909 = vmatprep.subr.mxu0 0.0
        %910 = vmatpush1.xpose.msra.mxu0 0.0
        %911 = vmatprep.subr.mxu0 0.0
        %912 = vmatpush1.xpose.msra.mxu0 0.0
        %913 = vmatprep.subr.mxu0 0.0
        %914 = vmatpush1.xpose.msra.mxu0 0.0
        %915 = vmatprep.subr.mxu0 0.0
        %916 = vmatpush1.xpose.msra.mxu0 0.0
        %917 = vmatprep.subr.mxu0 0.0
        %918 = vmatpush1.xpose.msra.mxu0 0.0
        %919 = vmatprep.subr.mxu0 0.0
        %920 = vmatpush1.xpose.msra.mxu0 0.0
        %921 = vmatprep.subr.mxu0 0.0
        %922 = vmatpush1.xpose.msra.mxu0 0.0
        %923 = vmatprep.subr.mxu0 0.0
        %924 = vmatpush1.xpose.msra.mxu0 0.0
        %925 = vmatprep.subr.mxu0 0.0
        %926 = vmatpush1.xpose.msra.mxu0 0.0
        %927 = vmatprep.subr.mxu0 0.0
        %928 = vmatpush1.xpose.msra.mxu0 0.0
        %929 = vmatprep.subr.mxu0 0.0
        %930 = vmatpush1.xpose.msra.mxu0 0.0
        %931 = vmatprep.mubr.f32.mxu0 %v345
        %932 = vmatmul.mubr.f32.gmra.mrb[0].mxu0 %v344
        %v933 = vpop.f32.mrb[0].mxu0
        %v934 = vadd.f32 %v864, %v933
        %v935 = vpop.f32.mrb[0].mxu0
        %936 = vdwg.mxu0
        %937 = vmatprep.subr.mxu0 %v379
        %938 = vmatpush1.xpose.msra.mxu0 %v378
        %939 = vmatprep.subr.mxu0 %v411
        %940 = vmatpush1.xpose.msra.mxu0 %v410
        %941 = vmatprep.subr.mxu0 0.0
        %942 = vmatpush1.xpose.msra.mxu0 0.0
        %943 = vmatprep.subr.mxu0 0.0
        %944 = vmatpush1.xpose.msra.mxu0 0.0
        %945 = vmatprep.subr.mxu0 0.0
        %946 = vmatpush1.xpose.msra.mxu0 0.0
        %947 = vmatprep.subr.mxu0 0.0
        %948 = vmatpush1.xpose.msra.mxu0 0.0
        %949 = vmatprep.subr.mxu0 0.0
        %950 = vmatpush1.xpose.msra.mxu0 0.0
        %951 = vmatprep.subr.mxu0 0.0
        %952 = vmatpush1.xpose.msra.mxu0 0.0
        %953 = vmatprep.subr.mxu0 0.0
        %954 = vmatpush1.xpose.msra.mxu0 0.0
        %955 = vmatprep.subr.mxu0 0.0
        %956 = vmatpush1.xpose.msra.mxu0 0.0
        %957 = vmatprep.subr.mxu0 0.0
        %958 = vmatpush1.xpose.msra.mxu0 0.0
        %959 = vmatprep.subr.mxu0 0.0
        %960 = vmatpush1.xpose.msra.mxu0 0.0
        %961 = vmatprep.subr.mxu0 0.0
        %962 = vmatpush1.xpose.msra.mxu0 0.0
        %963 = vmatprep.subr.mxu0 0.0
        %964 = vmatpush1.xpose.msra.mxu0 0.0
        %965 = vmatprep.subr.mxu0 0.0
        %966 = vmatpush1.xpose.msra.mxu0 0.0
        %967 = vmatprep.subr.mxu0 0.0
        %968 = vmatpush1.xpose.msra.mxu0 0.0
        %969 = vmatprep.subr.mxu0 0.0
        %970 = vmatpush1.xpose.msra.mxu0 0.0
        %971 = vmatprep.subr.mxu0 0.0
        %972 = vmatpush1.xpose.msra.mxu0 0.0
        %973 = vmatprep.subr.mxu0 0.0
        %974 = vmatpush1.xpose.msra.mxu0 0.0
        %975 = vmatprep.subr.mxu0 0.0
        %976 = vmatpush1.xpose.msra.mxu0 0.0
        %977 = vmatprep.subr.mxu0 0.0
        %978 = vmatpush1.xpose.msra.mxu0 0.0
        %979 = vmatprep.subr.mxu0 0.0
        %980 = vmatpush1.xpose.msra.mxu0 0.0
        %981 = vmatprep.subr.mxu0 0.0
        %982 = vmatpush1.xpose.msra.mxu0 0.0
        %983 = vmatprep.subr.mxu0 0.0
        %984 = vmatpush1.xpose.msra.mxu0 0.0
        %985 = vmatprep.subr.mxu0 0.0
        %986 = vmatpush1.xpose.msra.mxu0 0.0
        %987 = vmatprep.subr.mxu0 0.0
        %988 = vmatpush1.xpose.msra.mxu0 0.0
        %989 = vmatprep.subr.mxu0 0.0
        %990 = vmatpush1.xpose.msra.mxu0 0.0
        %991 = vmatprep.subr.mxu0 0.0
        %992 = vmatpush1.xpose.msra.mxu0 0.0
        %993 = vmatprep.subr.mxu0 0.0
        %994 = vmatpush1.xpose.msra.mxu0 0.0
        %995 = vmatprep.subr.mxu0 0.0
        %996 = vmatpush1.xpose.msra.mxu0 0.0
        %997 = vmatprep.subr.mxu0 0.0
        %998 = vmatpush1.xpose.msra.mxu0 0.0
        %999 = vmatprep.subr.mxu0 0.0
        %1000 = vmatpush1.xpose.msra.mxu0 0.0
        %1001 = vmatprep.mubr.f32.mxu0 %v347
        %1002 = vmatmul.mubr.f32.gmra.mrb[0].mxu0 %v346
        %v1003 = vpop.f32.mrb[0].mxu0
        %v1004 = vadd.f32 %v934, %v1003
        %v1005 = vpop.f32.mrb[0].mxu0
        %1006 = vdwg.mxu0
        %1007 = vmatprep.subr.mxu0 %v381
        %1008 = vmatpush1.xpose.msra.mxu0 %v380
        %1009 = vmatprep.subr.mxu0 %v413
        %1010 = vmatpush1.xpose.msra.mxu0 %v412
        %1011 = vmatprep.subr.mxu0 0.0
        %1012 = vmatpush1.xpose.msra.mxu0 0.0
        %1013 = vmatprep.subr.mxu0 0.0
        %1014 = vmatpush1.xpose.msra.mxu0 0.0
        %1015 = vmatprep.subr.mxu0 0.0
        %1016 = vmatpush1.xpose.msra.mxu0 0.0
        %1017 = vmatprep.subr.mxu0 0.0
        %1018 = vmatpush1.xpose.msra.mxu0 0.0
        %1019 = vmatprep.subr.mxu0 0.0
        %1020 = vmatpush1.xpose.msra.mxu0 0.0
        %1021 = vmatprep.subr.mxu0 0.0
        %1022 = vmatpush1.xpose.msra.mxu0 0.0
        %1023 = vmatprep.subr.mxu0 0.0
        %1024 = vmatpush1.xpose.msra.mxu0 0.0
        %1025 = vmatprep.subr.mxu0 0.0
        %1026 = vmatpush1.xpose.msra.mxu0 0.0
        %1027 = vmatprep.subr.mxu0 0.0
        %1028 = vmatpush1.xpose.msra.mxu0 0.0
        %1029 = vmatprep.subr.mxu0 0.0
        %1030 = vmatpush1.xpose.msra.mxu0 0.0
        %1031 = vmatprep.subr.mxu0 0.0
        %1032 = vmatpush1.xpose.msra.mxu0 0.0
        %1033 = vmatprep.subr.mxu0 0.0
        %1034 = vmatpush1.xpose.msra.mxu0 0.0
        %1035 = vmatprep.subr.mxu0 0.0
        %1036 = vmatpush1.xpose.msra.mxu0 0.0
        %1037 = vmatprep.subr.mxu0 0.0
        %1038 = vmatpush1.xpose.msra.mxu0 0.0
        %1039 = vmatprep.subr.mxu0 0.0
        %1040 = vmatpush1.xpose.msra.mxu0 0.0
        %1041 = vmatprep.subr.mxu0 0.0
        %1042 = vmatpush1.xpose.msra.mxu0 0.0
        %1043 = vmatprep.subr.mxu0 0.0
        %1044 = vmatpush1.xpose.msra.mxu0 0.0
        %1045 = vmatprep.subr.mxu0 0.0
        %1046 = vmatpush1.xpose.msra.mxu0 0.0
        %1047 = vmatprep.subr.mxu0 0.0
        %1048 = vmatpush1.xpose.msra.mxu0 0.0
        %1049 = vmatprep.subr.mxu0 0.0
        %1050 = vmatpush1.xpose.msra.mxu0 0.0
        %1051 = vmatprep.subr.mxu0 0.0
        %1052 = vmatpush1.xpose.msra.mxu0 0.0
        %1053 = vmatprep.subr.mxu0 0.0
        %1054 = vmatpush1.xpose.msra.mxu0 0.0
        %1055 = vmatprep.subr.mxu0 0.0
        %1056 = vmatpush1.xpose.msra.mxu0 0.0
        %1057 = vmatprep.subr.mxu0 0.0
        %1058 = vmatpush1.xpose.msra.mxu0 0.0
        %1059 = vmatprep.subr.mxu0 0.0
        %1060 = vmatpush1.xpose.msra.mxu0 0.0
        %1061 = vmatprep.subr.mxu0 0.0
        %1062 = vmatpush1.xpose.msra.mxu0 0.0
        %1063 = vmatprep.subr.mxu0 0.0
        %1064 = vmatpush1.xpose.msra.mxu0 0.0
        %1065 = vmatprep.subr.mxu0 0.0
        %1066 = vmatpush1.xpose.msra.mxu0 0.0
        %1067 = vmatprep.subr.mxu0 0.0
        %1068 = vmatpush1.xpose.msra.mxu0 0.0
        %1069 = vmatprep.subr.mxu0 0.0
        %1070 = vmatpush1.xpose.msra.mxu0 0.0
        %1071 = vmatprep.mubr.f32.mxu0 %v349
        %1072 = vmatmul.mubr.f32.gmra.mrb[0].mxu0 %v348
        %v1073 = vpop.f32.mrb[0].mxu0
        %v1074 = vadd.f32 %v1004, %v1073
        %v1075 = vpop.f32.mrb[0].mxu0
        %1076 = vdwg.mxu0
        %1077 = vmatprep.subr.mxu0 %v383
        %1078 = vmatpush1.xpose.msra.mxu0 %v382
        %1079 = vmatprep.subr.mxu0 %v415
        %1080 = vmatpush1.xpose.msra.mxu0 %v414
        %1081 = vmatprep.subr.mxu0 0.0
        %1082 = vmatpush1.xpose.msra.mxu0 0.0
        %1083 = vmatprep.subr.mxu0 0.0
        %1084 = vmatpush1.xpose.msra.mxu0 0.0
        %1085 = vmatprep.subr.mxu0 0.0
        %1086 = vmatpush1.xpose.msra.mxu0 0.0
        %1087 = vmatprep.subr.mxu0 0.0
        %1088 = vmatpush1.xpose.msra.mxu0 0.0
        %1089 = vmatprep.subr.mxu0 0.0
        %1090 = vmatpush1.xpose.msra.mxu0 0.0
        %1091 = vmatprep.subr.mxu0 0.0
        %1092 = vmatpush1.xpose.msra.mxu0 0.0
        %1093 = vmatprep.subr.mxu0 0.0
        %1094 = vmatpush1.xpose.msra.mxu0 0.0
        %1095 = vmatprep.subr.mxu0 0.0
        %1096 = vmatpush1.xpose.msra.mxu0 0.0
        %1097 = vmatprep.subr.mxu0 0.0
        %1098 = vmatpush1.xpose.msra.mxu0 0.0
        %1099 = vmatprep.subr.mxu0 0.0
        %1100 = vmatpush1.xpose.msra.mxu0 0.0
        %1101 = vmatprep.subr.mxu0 0.0
        %1102 = vmatpush1.xpose.msra.mxu0 0.0
        %1103 = vmatprep.subr.mxu0 0.0
        %1104 = vmatpush1.xpose.msra.mxu0 0.0
        %1105 = vmatprep.subr.mxu0 0.0
        %1106 = vmatpush1.xpose.msra.mxu0 0.0
        %1107 = vmatprep.subr.mxu0 0.0
        %1108 = vmatpush1.xpose.msra.mxu0 0.0
        %1109 = vmatprep.subr.mxu0 0.0
        %1110 = vmatpush1.xpose.msra.mxu0 0.0
        %1111 = vmatprep.subr.mxu0 0.0
        %1112 = vmatpush1.xpose.msra.mxu0 0.0
        %1113 = vmatprep.subr.mxu0 0.0
        %1114 = vmatpush1.xpose.msra.mxu0 0.0
        %1115 = vmatprep.subr.mxu0 0.0
        %1116 = vmatpush1.xpose.msra.mxu0 0.0
        %1117 = vmatprep.subr.mxu0 0.0
        %1118 = vmatpush1.xpose.msra.mxu0 0.0
        %1119 = vmatprep.subr.mxu0 0.0
        %1120 = vmatpush1.xpose.msra.mxu0 0.0
        %1121 = vmatprep.subr.mxu0 0.0
        %1122 = vmatpush1.xpose.msra.mxu0 0.0
        %1123 = vmatprep.subr.mxu0 0.0
        %1124 = vmatpush1.xpose.msra.mxu0 0.0
        %1125 = vmatprep.subr.mxu0 0.0
        %1126 = vmatpush1.xpose.msra.mxu0 0.0
        %1127 = vmatprep.subr.mxu0 0.0
        %1128 = vmatpush1.xpose.msra.mxu0 0.0
        %1129 = vmatprep.subr.mxu0 0.0
        %1130 = vmatpush1.xpose.msra.mxu0 0.0
        %1131 = vmatprep.subr.mxu0 0.0
        %1132 = vmatpush1.xpose.msra.mxu0 0.0
        %1133 = vmatprep.subr.mxu0 0.0
        %1134 = vmatpush1.xpose.msra.mxu0 0.0
        %1135 = vmatprep.subr.mxu0 0.0
        %1136 = vmatpush1.xpose.msra.mxu0 0.0
        %1137 = vmatprep.subr.mxu0 0.0
        %1138 = vmatpush1.xpose.msra.mxu0 0.0
        %1139 = vmatprep.subr.mxu0 0.0
        %1140 = vmatpush1.xpose.msra.mxu0 0.0
        %1141 = vmatprep.mubr.f32.mxu0 %v351
        %1142 = vmatmul.mubr.f32.gmra.mrb[0].mxu0 %v350
        %v1143 = vpop.f32.mrb[0].mxu0
        %v1144 = vadd.f32 %v1074, %v1143
        %v1145 = vpop.f32.mrb[0].mxu0
        %1146 = vdwg.mxu0
        %1147 = vmatprep.subr.mxu0 %v385
        %1148 = vmatpush1.xpose.msra.mxu0 %v384
        %1149 = vmatprep.subr.mxu0 %v417
        %1150 = vmatpush1.xpose.msra.mxu0 %v416
        %1151 = vmatprep.subr.mxu0 0.0
        %1152 = vmatpush1.xpose.msra.mxu0 0.0
        %1153 = vmatprep.subr.mxu0 0.0
        %1154 = vmatpush1.xpose.msra.mxu0 0.0
        %1155 = vmatprep.subr.mxu0 0.0
        %1156 = vmatpush1.xpose.msra.mxu0 0.0
        %1157 = vmatprep.subr.mxu0 0.0
        %1158 = vmatpush1.xpose.msra.mxu0 0.0
        %1159 = vmatprep.subr.mxu0 0.0
        %1160 = vmatpush1.xpose.msra.mxu0 0.0
        %1161 = vmatprep.subr.mxu0 0.0
        %1162 = vmatpush1.xpose.msra.mxu0 0.0
        %1163 = vmatprep.subr.mxu0 0.0
        %1164 = vmatpush1.xpose.msra.mxu0 0.0
        %1165 = vmatprep.subr.mxu0 0.0
        %1166 = vmatpush1.xpose.msra.mxu0 0.0
        %1167 = vmatprep.subr.mxu0 0.0
        %1168 = vmatpush1.xpose.msra.mxu0 0.0
        %1169 = vmatprep.subr.mxu0 0.0
        %1170 = vmatpush1.xpose.msra.mxu0 0.0
        %1171 = vmatprep.subr.mxu0 0.0
        %1172 = vmatpush1.xpose.msra.mxu0 0.0
        %1173 = vmatprep.subr.mxu0 0.0
        %1174 = vmatpush1.xpose.msra.mxu0 0.0
        %1175 = vmatprep.subr.mxu0 0.0
        %1176 = vmatpush1.xpose.msra.mxu0 0.0
        %1177 = vmatprep.subr.mxu0 0.0
        %1178 = vmatpush1.xpose.msra.mxu0 0.0
        %1179 = vmatprep.subr.mxu0 0.0
        %1180 = vmatpush1.xpose.msra.mxu0 0.0
        %1181 = vmatprep.subr.mxu0 0.0
        %1182 = vmatpush1.xpose.msra.mxu0 0.0
        %1183 = vmatprep.subr.mxu0 0.0
        %1184 = vmatpush1.xpose.msra.mxu0 0.0
        %1185 = vmatprep.subr.mxu0 0.0
        %1186 = vmatpush1.xpose.msra.mxu0 0.0
        %1187 = vmatprep.subr.mxu0 0.0
        %1188 = vmatpush1.xpose.msra.mxu0 0.0
        %1189 = vmatprep.subr.mxu0 0.0
        %1190 = vmatpush1.xpose.msra.mxu0 0.0
        %1191 = vmatprep.subr.mxu0 0.0
        %1192 = vmatpush1.xpose.msra.mxu0 0.0
        %1193 = vmatprep.subr.mxu0 0.0
        %1194 = vmatpush1.xpose.msra.mxu0 0.0
        %1195 = vmatprep.subr.mxu0 0.0
        %1196 = vmatpush1.xpose.msra.mxu0 0.0
        %1197 = vmatprep.subr.mxu0 0.0
        %1198 = vmatpush1.xpose.msra.mxu0 0.0
        %1199 = vmatprep.subr.mxu0 0.0
        %1200 = vmatpush1.xpose.msra.mxu0 0.0
        %1201 = vmatprep.subr.mxu0 0.0
        %1202 = vmatpush1.xpose.msra.mxu0 0.0
        %1203 = vmatprep.subr.mxu0 0.0
        %1204 = vmatpush1.xpose.msra.mxu0 0.0
        %1205 = vmatprep.subr.mxu0 0.0
        %1206 = vmatpush1.xpose.msra.mxu0 0.0
        %1207 = vmatprep.subr.mxu0 0.0
        %1208 = vmatpush1.xpose.msra.mxu0 0.0
        %1209 = vmatprep.subr.mxu0 0.0
        %1210 = vmatpush1.xpose.msra.mxu0 0.0
        %1211 = vmatprep.mubr.f32.mxu0 %v353
        %1212 = vmatmul.mubr.f32.gmra.mrb[0].mxu0 %v352
        %v1213 = vpop.f32.mrb[0].mxu0
        %v1214 = vadd.f32 %v1144, %v1213
        %v1215 = vpop.f32.mrb[0].mxu0
        %1216 = vdwg.mxu0
        %1217 = vmatprep.subr.mxu0 %v387
        %1218 = vmatpush1.xpose.msra.mxu0 %v386
        %1219 = vmatprep.subr.mxu0 %v419
        %1220 = vmatpush1.xpose.msra.mxu0 %v418
        %1221 = vmatprep.subr.mxu0 0.0
        %1222 = vmatpush1.xpose.msra.mxu0 0.0
        %1223 = vmatprep.subr.mxu0 0.0
        %1224 = vmatpush1.xpose.msra.mxu0 0.0
        %1225 = vmatprep.subr.mxu0 0.0
        %1226 = vmatpush1.xpose.msra.mxu0 0.0
        %1227 = vmatprep.subr.mxu0 0.0
        %1228 = vmatpush1.xpose.msra.mxu0 0.0
        %1229 = vmatprep.subr.mxu0 0.0
        %1230 = vmatpush1.xpose.msra.mxu0 0.0
        %1231 = vmatprep.subr.mxu0 0.0
        %1232 = vmatpush1.xpose.msra.mxu0 0.0
        %1233 = vmatprep.subr.mxu0 0.0
        %1234 = vmatpush1.xpose.msra.mxu0 0.0
        %1235 = vmatprep.subr.mxu0 0.0
        %1236 = vmatpush1.xpose.msra.mxu0 0.0
        %1237 = vmatprep.subr.mxu0 0.0
        %1238 = vmatpush1.xpose.msra.mxu0 0.0
        %1239 = vmatprep.subr.mxu0 0.0
        %1240 = vmatpush1.xpose.msra.mxu0 0.0
        %1241 = vmatprep.subr.mxu0 0.0
        %1242 = vmatpush1.xpose.msra.mxu0 0.0
        %1243 = vmatprep.subr.mxu0 0.0
        %1244 = vmatpush1.xpose.msra.mxu0 0.0
        %1245 = vmatprep.subr.mxu0 0.0
        %1246 = vmatpush1.xpose.msra.mxu0 0.0
        %1247 = vmatprep.subr.mxu0 0.0
        %1248 = vmatpush1.xpose.msra.mxu0 0.0
        %1249 = vmatprep.subr.mxu0 0.0
        %1250 = vmatpush1.xpose.msra.mxu0 0.0
        %1251 = vmatprep.subr.mxu0 0.0
        %1252 = vmatpush1.xpose.msra.mxu0 0.0
        %1253 = vmatprep.subr.mxu0 0.0
        %1254 = vmatpush1.xpose.msra.mxu0 0.0
        %1255 = vmatprep.subr.mxu0 0.0
        %1256 = vmatpush1.xpose.msra.mxu0 0.0
        %1257 = vmatprep.subr.mxu0 0.0
        %1258 = vmatpush1.xpose.msra.mxu0 0.0
        %1259 = vmatprep.subr.mxu0 0.0
        %1260 = vmatpush1.xpose.msra.mxu0 0.0
        %1261 = vmatprep.subr.mxu0 0.0
        %1262 = vmatpush1.xpose.msra.mxu0 0.0
        %1263 = vmatprep.subr.mxu0 0.0
        %1264 = vmatpush1.xpose.msra.mxu0 0.0
        %1265 = vmatprep.subr.mxu0 0.0
        %1266 = vmatpush1.xpose.msra.mxu0 0.0
        %1267 = vmatprep.subr.mxu0 0.0
        %1268 = vmatpush1.xpose.msra.mxu0 0.0
        %1269 = vmatprep.subr.mxu0 0.0
        %1270 = vmatpush1.xpose.msra.mxu0 0.0
        %1271 = vmatprep.subr.mxu0 0.0
        %1272 = vmatpush1.xpose.msra.mxu0 0.0
        %1273 = vmatprep.subr.mxu0 0.0
        %1274 = vmatpush1.xpose.msra.mxu0 0.0
        %1275 = vmatprep.subr.mxu0 0.0
        %1276 = vmatpush1.xpose.msra.mxu0 0.0
        %1277 = vmatprep.subr.mxu0 0.0
        %1278 = vmatpush1.xpose.msra.mxu0 0.0
        %1279 = vmatprep.subr.mxu0 0.0
        %1280 = vmatpush1.xpose.msra.mxu0 0.0
        %1281 = vmatprep.mubr.f32.mxu0 %v355
        %1282 = vmatmul.mubr.f32.gmra.mrb[0].mxu0 %v354
        %v1283 = vpop.f32.mrb[0].mxu0
        %v1284 = vadd.f32 %v1214, %v1283
        %v1285 = vpop.f32.mrb[0].mxu0
        %1286 = vdwg.mxu0
        %1287 = vmatprep.subr.mxu0 %v389
        %1288 = vmatpush1.xpose.msra.mxu0 %v388
        %1289 = vmatprep.subr.mxu0 %v421
        %1290 = vmatpush1.xpose.msra.mxu0 %v420
        %1291 = vmatprep.subr.mxu0 0.0
        %1292 = vmatpush1.xpose.msra.mxu0 0.0
        %1293 = vmatprep.subr.mxu0 0.0
        %1294 = vmatpush1.xpose.msra.mxu0 0.0
        %1295 = vmatprep.subr.mxu0 0.0
        %1296 = vmatpush1.xpose.msra.mxu0 0.0
        %1297 = vmatprep.subr.mxu0 0.0
        %1298 = vmatpush1.xpose.msra.mxu0 0.0
        %1299 = vmatprep.subr.mxu0 0.0
        %1300 = vmatpush1.xpose.msra.mxu0 0.0
        %1301 = vmatprep.subr.mxu0 0.0
        %1302 = vmatpush1.xpose.msra.mxu0 0.0
        %1303 = vmatprep.subr.mxu0 0.0
        %1304 = vmatpush1.xpose.msra.mxu0 0.0
        %1305 = vmatprep.subr.mxu0 0.0
        %1306 = vmatpush1.xpose.msra.mxu0 0.0
        %1307 = vmatprep.subr.mxu0 0.0
        %1308 = vmatpush1.xpose.msra.mxu0 0.0
        %1309 = vmatprep.subr.mxu0 0.0
        %1310 = vmatpush1.xpose.msra.mxu0 0.0
        %1311 = vmatprep.subr.mxu0 0.0
        %1312 = vmatpush1.xpose.msra.mxu0 0.0
        %1313 = vmatprep.subr.mxu0 0.0
        %1314 = vmatpush1.xpose.msra.mxu0 0.0
        %1315 = vmatprep.subr.mxu0 0.0
        %1316 = vmatpush1.xpose.msra.mxu0 0.0
        %1317 = vmatprep.subr.mxu0 0.0
        %1318 = vmatpush1.xpose.msra.mxu0 0.0
        %1319 = vmatprep.subr.mxu0 0.0
        %1320 = vmatpush1.xpose.msra.mxu0 0.0
        %1321 = vmatprep.subr.mxu0 0.0
        %1322 = vmatpush1.xpose.msra.mxu0 0.0
        %1323 = vmatprep.subr.mxu0 0.0
        %1324 = vmatpush1.xpose.msra.mxu0 0.0
        %1325 = vmatprep.subr.mxu0 0.0
        %1326 = vmatpush1.xpose.msra.mxu0 0.0
        %1327 = vmatprep.subr.mxu0 0.0
        %1328 = vmatpush1.xpose.msra.mxu0 0.0
        %1329 = vmatprep.subr.mxu0 0.0
        %1330 = vmatpush1.xpose.msra.mxu0 0.0
        %1331 = vmatprep.subr.mxu0 0.0
        %1332 = vmatpush1.xpose.msra.mxu0 0.0
        %1333 = vmatprep.subr.mxu0 0.0
        %1334 = vmatpush1.xpose.msra.mxu0 0.0
        %1335 = vmatprep.subr.mxu0 0.0
        %1336 = vmatpush1.xpose.msra.mxu0 0.0
        %1337 = vmatprep.subr.mxu0 0.0
        %1338 = vmatpush1.xpose.msra.mxu0 0.0
        %1339 = vmatprep.subr.mxu0 0.0
        %1340 = vmatpush1.xpose.msra.mxu0 0.0
        %1341 = vmatprep.subr.mxu0 0.0
        %1342 = vmatpush1.xpose.msra.mxu0 0.0
        %1343 = vmatprep.subr.mxu0 0.0
        %1344 = vmatpush1.xpose.msra.mxu0 0.0
        %1345 = vmatprep.subr.mxu0 0.0
        %1346 = vmatpush1.xpose.msra.mxu0 0.0
        %1347 = vmatprep.subr.mxu0 0.0
        %1348 = vmatpush1.xpose.msra.mxu0 0.0
        %1349 = vmatprep.subr.mxu0 0.0
        %1350 = vmatpush1.xpose.msra.mxu0 0.0
        %1351 = vmatprep.mubr.f32.mxu0 %v357
        %1352 = vmatmul.mubr.f32.gmra.mrb[0].mxu0 %v356
        %v1353 = vpop.f32.mrb[0].mxu0
        %v1354 = vadd.f32 %v1284, %v1353
        %v1355 = vpop.f32.mrb[0].mxu0
        %1356 = vdwg.mxu0
        %1357 = vmatprep.subr.mxu0 %v391
        %1358 = vmatpush1.xpose.msra.mxu0 %v390
        %1359 = vmatprep.subr.mxu0 %v423
        %1360 = vmatpush1.xpose.msra.mxu0 %v422
        %1361 = vmatprep.subr.mxu0 0.0
        %1362 = vmatpush1.xpose.msra.mxu0 0.0
        %1363 = vmatprep.subr.mxu0 0.0
        %1364 = vmatpush1.xpose.msra.mxu0 0.0
        %1365 = vmatprep.subr.mxu0 0.0
        %1366 = vmatpush1.xpose.msra.mxu0 0.0
        %1367 = vmatprep.subr.mxu0 0.0
        %1368 = vmatpush1.xpose.msra.mxu0 0.0
        %1369 = vmatprep.subr.mxu0 0.0
        %1370 = vmatpush1.xpose.msra.mxu0 0.0
        %1371 = vmatprep.subr.mxu0 0.0
        %1372 = vmatpush1.xpose.msra.mxu0 0.0
        %1373 = vmatprep.subr.mxu0 0.0
        %1374 = vmatpush1.xpose.msra.mxu0 0.0
        %1375 = vmatprep.subr.mxu0 0.0
        %1376 = vmatpush1.xpose.msra.mxu0 0.0
        %1377 = vmatprep.subr.mxu0 0.0
        %1378 = vmatpush1.xpose.msra.mxu0 0.0
        %1379 = vmatprep.subr.mxu0 0.0
        %1380 = vmatpush1.xpose.msra.mxu0 0.0
        %1381 = vmatprep.subr.mxu0 0.0
        %1382 = vmatpush1.xpose.msra.mxu0 0.0
        %1383 = vmatprep.subr.mxu0 0.0
        %1384 = vmatpush1.xpose.msra.mxu0 0.0
        %1385 = vmatprep.subr.mxu0 0.0
        %1386 = vmatpush1.xpose.msra.mxu0 0.0
        %1387 = vmatprep.subr.mxu0 0.0
        %1388 = vmatpush1.xpose.msra.mxu0 0.0
        %1389 = vmatprep.subr.mxu0 0.0
        %1390 = vmatpush1.xpose.msra.mxu0 0.0
        %1391 = vmatprep.subr.mxu0 0.0
        %1392 = vmatpush1.xpose.msra.mxu0 0.0
        %1393 = vmatprep.subr.mxu0 0.0
        %1394 = vmatpush1.xpose.msra.mxu0 0.0
        %1395 = vmatprep.subr.mxu0 0.0
        %1396 = vmatpush1.xpose.msra.mxu0 0.0
        %1397 = vmatprep.subr.mxu0 0.0
        %1398 = vmatpush1.xpose.msra.mxu0 0.0
        %1399 = vmatprep.subr.mxu0 0.0
        %1400 = vmatpush1.xpose.msra.mxu0 0.0
        %1401 = vmatprep.subr.mxu0 0.0
        %1402 = vmatpush1.xpose.msra.mxu0 0.0
        %1403 = vmatprep.subr.mxu0 0.0
        %1404 = vmatpush1.xpose.msra.mxu0 0.0
        %1405 = vmatprep.subr.mxu0 0.0
        %1406 = vmatpush1.xpose.msra.mxu0 0.0
        %1407 = vmatprep.subr.mxu0 0.0
        %1408 = vmatpush1.xpose.msra.mxu0 0.0
        %1409 = vmatprep.subr.mxu0 0.0
        %1410 = vmatpush1.xpose.msra.mxu0 0.0
        %1411 = vmatprep.subr.mxu0 0.0
        %1412 = vmatpush1.xpose.msra.mxu0 0.0
        %1413 = vmatprep.subr.mxu0 0.0
        %1414 = vmatpush1.xpose.msra.mxu0 0.0
        %1415 = vmatprep.subr.mxu0 0.0
        %1416 = vmatpush1.xpose.msra.mxu0 0.0
        %1417 = vmatprep.subr.mxu0 0.0
        %1418 = vmatpush1.xpose.msra.mxu0 0.0
        %1419 = vmatprep.subr.mxu0 0.0
        %1420 = vmatpush1.xpose.msra.mxu0 0.0
        %1421 = vmatprep.mubr.f32.mxu0 %v359
        %1422 = vmatmul.mubr.f32.gmra.mrb[0].mxu0 %v358
        %v1423 = vpop.f32.mrb[0].mxu0
        %v1424 = vadd.f32 %v1354, %v1423
        %v1425 = vpop.f32.mrb[0].mxu0
        %1426 = vdwg.mxu0
        %1427 = vmatprep.subr.mxu0 %v393
        %1428 = vmatpush1.xpose.msra.mxu0 %v392
        %1429 = vmatprep.subr.mxu0 %v425
        %1430 = vmatpush1.xpose.msra.mxu0 %v424
        %1431 = vmatprep.subr.mxu0 0.0
        %1432 = vmatpush1.xpose.msra.mxu0 0.0
        %1433 = vmatprep.subr.mxu0 0.0
        %1434 = vmatpush1.xpose.msra.mxu0 0.0
        %1435 = vmatprep.subr.mxu0 0.0
        %1436 = vmatpush1.xpose.msra.mxu0 0.0
        %1437 = vmatprep.subr.mxu0 0.0
        %1438 = vmatpush1.xpose.msra.mxu0 0.0
        %1439 = vmatprep.subr.mxu0 0.0
        %1440 = vmatpush1.xpose.msra.mxu0 0.0
        %1441 = vmatprep.subr.mxu0 0.0
        %1442 = vmatpush1.xpose.msra.mxu0 0.0
        %1443 = vmatprep.subr.mxu0 0.0
        %1444 = vmatpush1.xpose.msra.mxu0 0.0
        %1445 = vmatprep.subr.mxu0 0.0
        %1446 = vmatpush1.xpose.msra.mxu0 0.0
        %1447 = vmatprep.subr.mxu0 0.0
        %1448 = vmatpush1.xpose.msra.mxu0 0.0
        %1449 = vmatprep.subr.mxu0 0.0
        %1450 = vmatpush1.xpose.msra.mxu0 0.0
        %1451 = vmatprep.subr.mxu0 0.0
        %1452 = vmatpush1.xpose.msra.mxu0 0.0
        %1453 = vmatprep.subr.mxu0 0.0
        %1454 = vmatpush1.xpose.msra.mxu0 0.0
        %1455 = vmatprep.subr.mxu0 0.0
        %1456 = vmatpush1.xpose.msra.mxu0 0.0
        %1457 = vmatprep.subr.mxu0 0.0
        %1458 = vmatpush1.xpose.msra.mxu0 0.0
        %1459 = vmatprep.subr.mxu0 0.0
        %1460 = vmatpush1.xpose.msra.mxu0 0.0
        %1461 = vmatprep.subr.mxu0 0.0
        %1462 = vmatpush1.xpose.msra.mxu0 0.0
        %1463 = vmatprep.subr.mxu0 0.0
        %1464 = vmatpush1.xpose.msra.mxu0 0.0
        %1465 = vmatprep.subr.mxu0 0.0
        %1466 = vmatpush1.xpose.msra.mxu0 0.0
        %1467 = vmatprep.subr.mxu0 0.0
        %1468 = vmatpush1.xpose.msra.mxu0 0.0
        %1469 = vmatprep.subr.mxu0 0.0
        %1470 = vmatpush1.xpose.msra.mxu0 0.0
        %1471 = vmatprep.subr.mxu0 0.0
        %1472 = vmatpush1.xpose.msra.mxu0 0.0
        %1473 = vmatprep.subr.mxu0 0.0
        %1474 = vmatpush1.xpose.msra.mxu0 0.0
        %1475 = vmatprep.subr.mxu0 0.0
        %1476 = vmatpush1.xpose.msra.mxu0 0.0
        %1477 = vmatprep.subr.mxu0 0.0
        %1478 = vmatpush1.xpose.msra.mxu0 0.0
        %1479 = vmatprep.subr.mxu0 0.0
        %1480 = vmatpush1.xpose.msra.mxu0 0.0
        %1481 = vmatprep.subr.mxu0 0.0
        %1482 = vmatpush1.xpose.msra.mxu0 0.0
        %1483 = vmatprep.subr.mxu0 0.0
        %1484 = vmatpush1.xpose.msra.mxu0 0.0
        %1485 = vmatprep.subr.mxu0 0.0
        %1486 = vmatpush1.xpose.msra.mxu0 0.0
        %1487 = vmatprep.subr.mxu0 0.0
        %1488 = vmatpush1.xpose.msra.mxu0 0.0
        %1489 = vmatprep.subr.mxu0 0.0
        %1490 = vmatpush1.xpose.msra.mxu0 0.0
        %1491 = vmatprep.mubr.f32.mxu0 %v361
        %1492 = vmatmul.mubr.f32.gmra.mrb[0].mxu0 %v360
        %v1493 = vpop.f32.mrb[0].mxu0
        %v1494 = vadd.f32 %v1424, %v1493
        %v1495 = vpop.f32.mrb[0].mxu0
        %1496 = vdwg.mxu0
        %1497 = vmatprep.subr.mxu0 %v395
        %1498 = vmatpush1.xpose.msra.mxu0 %v394
        %1499 = vmatprep.subr.mxu0 %v427
        %1500 = vmatpush1.xpose.msra.mxu0 %v426
        %1501 = vmatprep.subr.mxu0 0.0
        %1502 = vmatpush1.xpose.msra.mxu0 0.0
        %1503 = vmatprep.subr.mxu0 0.0
        %1504 = vmatpush1.xpose.msra.mxu0 0.0
        %1505 = vmatprep.subr.mxu0 0.0
        %1506 = vmatpush1.xpose.msra.mxu0 0.0
        %1507 = vmatprep.subr.mxu0 0.0
        %1508 = vmatpush1.xpose.msra.mxu0 0.0
        %1509 = vmatprep.subr.mxu0 0.0
        %1510 = vmatpush1.xpose.msra.mxu0 0.0
        %1511 = vmatprep.subr.mxu0 0.0
        %1512 = vmatpush1.xpose.msra.mxu0 0.0
        %1513 = vmatprep.subr.mxu0 0.0
        %1514 = vmatpush1.xpose.msra.mxu0 0.0
        %1515 = vmatprep.subr.mxu0 0.0
        %1516 = vmatpush1.xpose.msra.mxu0 0.0
        %1517 = vmatprep.subr.mxu0 0.0
        %1518 = vmatpush1.xpose.msra.mxu0 0.0
        %1519 = vmatprep.subr.mxu0 0.0
        %1520 = vmatpush1.xpose.msra.mxu0 0.0
        %1521 = vmatprep.subr.mxu0 0.0
        %1522 = vmatpush1.xpose.msra.mxu0 0.0
        %1523 = vmatprep.subr.mxu0 0.0
        %1524 = vmatpush1.xpose.msra.mxu0 0.0
        %1525 = vmatprep.subr.mxu0 0.0
        %1526 = vmatpush1.xpose.msra.mxu0 0.0
        %1527 = vmatprep.subr.mxu0 0.0
        %1528 = vmatpush1.xpose.msra.mxu0 0.0
        %1529 = vmatprep.subr.mxu0 0.0
        %1530 = vmatpush1.xpose.msra.mxu0 0.0
        %1531 = vmatprep.subr.mxu0 0.0
        %1532 = vmatpush1.xpose.msra.mxu0 0.0
        %1533 = vmatprep.subr.mxu0 0.0
        %1534 = vmatpush1.xpose.msra.mxu0 0.0
        %1535 = vmatprep.subr.mxu0 0.0
        %1536 = vmatpush1.xpose.msra.mxu0 0.0
        %1537 = vmatprep.subr.mxu0 0.0
        %1538 = vmatpush1.xpose.msra.mxu0 0.0
        %1539 = vmatprep.subr.mxu0 0.0
        %1540 = vmatpush1.xpose.msra.mxu0 0.0
        %1541 = vmatprep.subr.mxu0 0.0
        %1542 = vmatpush1.xpose.msra.mxu0 0.0
        %1543 = vmatprep.subr.mxu0 0.0
        %1544 = vmatpush1.xpose.msra.mxu0 0.0
        %1545 = vmatprep.subr.mxu0 0.0
        %1546 = vmatpush1.xpose.msra.mxu0 0.0
        %1547 = vmatprep.subr.mxu0 0.0
        %1548 = vmatpush1.xpose.msra.mxu0 0.0
        %1549 = vmatprep.subr.mxu0 0.0
        %1550 = vmatpush1.xpose.msra.mxu0 0.0
        %1551 = vmatprep.subr.mxu0 0.0
        %1552 = vmatpush1.xpose.msra.mxu0 0.0
        %1553 = vmatprep.subr.mxu0 0.0
        %1554 = vmatpush1.xpose.msra.mxu0 0.0
        %1555 = vmatprep.subr.mxu0 0.0
        %1556 = vmatpush1.xpose.msra.mxu0 0.0
        %1557 = vmatprep.subr.mxu0 0.0
        %1558 = vmatpush1.xpose.msra.mxu0 0.0
        %1559 = vmatprep.subr.mxu0 0.0
        %1560 = vmatpush1.xpose.msra.mxu0 0.0
        %1561 = vmatprep.mubr.f32.mxu0 %v363
        %1562 = vmatmul.mubr.f32.gmra.mrb[0].mxu0 %v362
        %v1563 = vpop.f32.mrb[0].mxu0
        %v1564 = vadd.f32 %v1494, %v1563
        %v1565 = vpop.f32.mrb[0].mxu0
        %1566 = vdwg.mxu0
        %1567 = vmatprep.subr.mxu0 %v397
        %1568 = vmatpush1.xpose.msra.mxu0 %v396
        %1569 = vmatprep.subr.mxu0 %v429
        %1570 = vmatpush1.xpose.msra.mxu0 %v428
        %1571 = vmatprep.subr.mxu0 0.0
        %1572 = vmatpush1.xpose.msra.mxu0 0.0
        %1573 = vmatprep.subr.mxu0 0.0
        %1574 = vmatpush1.xpose.msra.mxu0 0.0
        %1575 = vmatprep.subr.mxu0 0.0
        %1576 = vmatpush1.xpose.msra.mxu0 0.0
        %1577 = vmatprep.subr.mxu0 0.0
        %1578 = vmatpush1.xpose.msra.mxu0 0.0
        %1579 = vmatprep.subr.mxu0 0.0
        %1580 = vmatpush1.xpose.msra.mxu0 0.0
        %1581 = vmatprep.subr.mxu0 0.0
        %1582 = vmatpush1.xpose.msra.mxu0 0.0
        %1583 = vmatprep.subr.mxu0 0.0
        %1584 = vmatpush1.xpose.msra.mxu0 0.0
        %1585 = vmatprep.subr.mxu0 0.0
        %1586 = vmatpush1.xpose.msra.mxu0 0.0
        %1587 = vmatprep.subr.mxu0 0.0
        %1588 = vmatpush1.xpose.msra.mxu0 0.0
        %1589 = vmatprep.subr.mxu0 0.0
        %1590 = vmatpush1.xpose.msra.mxu0 0.0
        %1591 = vmatprep.subr.mxu0 0.0
        %1592 = vmatpush1.xpose.msra.mxu0 0.0
        %1593 = vmatprep.subr.mxu0 0.0
        %1594 = vmatpush1.xpose.msra.mxu0 0.0
        %1595 = vmatprep.subr.mxu0 0.0
        %1596 = vmatpush1.xpose.msra.mxu0 0.0
        %1597 = vmatprep.subr.mxu0 0.0
        %1598 = vmatpush1.xpose.msra.mxu0 0.0
        %1599 = vmatprep.subr.mxu0 0.0
        %1600 = vmatpush1.xpose.msra.mxu0 0.0
        %1601 = vmatprep.subr.mxu0 0.0
        %1602 = vmatpush1.xpose.msra.mxu0 0.0
        %1603 = vmatprep.subr.mxu0 0.0
        %1604 = vmatpush1.xpose.msra.mxu0 0.0
        %1605 = vmatprep.subr.mxu0 0.0
        %1606 = vmatpush1.xpose.msra.mxu0 0.0
        %1607 = vmatprep.subr.mxu0 0.0
        %1608 = vmatpush1.xpose.msra.mxu0 0.0
        %1609 = vmatprep.subr.mxu0 0.0
        %1610 = vmatpush1.xpose.msra.mxu0 0.0
        %1611 = vmatprep.subr.mxu0 0.0
        %1612 = vmatpush1.xpose.msra.mxu0 0.0
        %1613 = vmatprep.subr.mxu0 0.0
        %1614 = vmatpush1.xpose.msra.mxu0 0.0
        %1615 = vmatprep.subr.mxu0 0.0
        %1616 = vmatpush1.xpose.msra.mxu0 0.0
        %1617 = vmatprep.subr.mxu0 0.0
        %1618 = vmatpush1.xpose.msra.mxu0 0.0
        %1619 = vmatprep.subr.mxu0 0.0
        %1620 = vmatpush1.xpose.msra.mxu0 0.0
        %1621 = vmatprep.subr.mxu0 0.0
        %1622 = vmatpush1.xpose.msra.mxu0 0.0
        %1623 = vmatprep.subr.mxu0 0.0
        %1624 = vmatpush1.xpose.msra.mxu0 0.0
        %1625 = vmatprep.subr.mxu0 0.0
        %1626 = vmatpush1.xpose.msra.mxu0 0.0
        %1627 = vmatprep.subr.mxu0 0.0
        %1628 = vmatpush1.xpose.msra.mxu0 0.0
        %1629 = vmatprep.subr.mxu0 0.0
        %1630 = vmatpush1.xpose.msra.mxu0 0.0
        %1631 = vmatprep.mubr.f32.mxu0 %v365
        %1632 = vmatmul.mubr.f32.gmra.mrb[0].mxu0 %v364
        %v1633 = vpop.f32.mrb[0].mxu0
        %v1634 = vadd.f32 %v1564, %v1633
        %v1635 = vpop.f32.mrb[0].mxu0
        %1636 = vdwg.mxu0
        %1637 = vmatprep.subr.mxu0 %v399
        %1638 = vmatpush1.xpose.msra.mxu0 %v398
        %1639 = vmatprep.subr.mxu0 %v431
        %1640 = vmatpush1.xpose.msra.mxu0 %v430
        %1641 = vmatprep.subr.mxu0 0.0
        %1642 = vmatpush1.xpose.msra.mxu0 0.0
        %1643 = vmatprep.subr.mxu0 0.0
        %1644 = vmatpush1.xpose.msra.mxu0 0.0
        %1645 = vmatprep.subr.mxu0 0.0
        %1646 = vmatpush1.xpose.msra.mxu0 0.0
        %1647 = vmatprep.subr.mxu0 0.0
        %1648 = vmatpush1.xpose.msra.mxu0 0.0
        %1649 = vmatprep.subr.mxu0 0.0
        %1650 = vmatpush1.xpose.msra.mxu0 0.0
        %1651 = vmatprep.subr.mxu0 0.0
        %1652 = vmatpush1.xpose.msra.mxu0 0.0
        %1653 = vmatprep.subr.mxu0 0.0
        %1654 = vmatpush1.xpose.msra.mxu0 0.0
        %1655 = vmatprep.subr.mxu0 0.0
        %1656 = vmatpush1.xpose.msra.mxu0 0.0
        %1657 = vmatprep.subr.mxu0 0.0
        %1658 = vmatpush1.xpose.msra.mxu0 0.0
        %1659 = vmatprep.subr.mxu0 0.0
        %1660 = vmatpush1.xpose.msra.mxu0 0.0
        %1661 = vmatprep.subr.mxu0 0.0
        %1662 = vmatpush1.xpose.msra.mxu0 0.0
        %1663 = vmatprep.subr.mxu0 0.0
        %1664 = vmatpush1.xpose.msra.mxu0 0.0
        %1665 = vmatprep.subr.mxu0 0.0
        %1666 = vmatpush1.xpose.msra.mxu0 0.0
        %1667 = vmatprep.subr.mxu0 0.0
        %1668 = vmatpush1.xpose.msra.mxu0 0.0
        %1669 = vmatprep.subr.mxu0 0.0
        %1670 = vmatpush1.xpose.msra.mxu0 0.0
        %1671 = vmatprep.subr.mxu0 0.0
        %1672 = vmatpush1.xpose.msra.mxu0 0.0
        %1673 = vmatprep.subr.mxu0 0.0
        %1674 = vmatpush1.xpose.msra.mxu0 0.0
        %1675 = vmatprep.subr.mxu0 0.0
        %1676 = vmatpush1.xpose.msra.mxu0 0.0
        %1677 = vmatprep.subr.mxu0 0.0
        %1678 = vmatpush1.xpose.msra.mxu0 0.0
        %1679 = vmatprep.subr.mxu0 0.0
        %1680 = vmatpush1.xpose.msra.mxu0 0.0
        %1681 = vmatprep.subr.mxu0 0.0
        %1682 = vmatpush1.xpose.msra.mxu0 0.0
        %1683 = vmatprep.subr.mxu0 0.0
        %1684 = vmatpush1.xpose.msra.mxu0 0.0
        %1685 = vmatprep.subr.mxu0 0.0
        %1686 = vmatpush1.xpose.msra.mxu0 0.0
        %1687 = vmatprep.subr.mxu0 0.0
        %1688 = vmatpush1.xpose.msra.mxu0 0.0
        %1689 = vmatprep.subr.mxu0 0.0
        %1690 = vmatpush1.xpose.msra.mxu0 0.0
        %1691 = vmatprep.subr.mxu0 0.0
        %1692 = vmatpush1.xpose.msra.mxu0 0.0
        %1693 = vmatprep.subr.mxu0 0.0
        %1694 = vmatpush1.xpose.msra.mxu0 0.0
        %1695 = vmatprep.subr.mxu0 0.0
        %1696 = vmatpush1.xpose.msra.mxu0 0.0
        %1697 = vmatprep.subr.mxu0 0.0
        %1698 = vmatpush1.xpose.msra.mxu0 0.0
        %1699 = vmatprep.subr.mxu0 0.0
        %1700 = vmatpush1.xpose.msra.mxu0 0.0
        %1701 = vmatprep.mubr.f32.mxu0 %v367
        %1702 = vmatmul.mubr.f32.gmra.mrb[0].mxu0 %v366
        %v1703 = vpop.f32.mrb[0].mxu0
        %v1704 = vadd.f32 %v1634, %v1703
        %v1705 = vpop.f32.mrb[0].mxu0
        %1706 = vdwg.mxu0
        %1707 = vmatprep.subr.mxu0 %v401
        %1708 = vmatpush1.xpose.msra.mxu0 %v400
        %1709 = vmatprep.subr.mxu0 %v433
        %1710 = vmatpush1.xpose.msra.mxu0 %v432
        %1711 = vmatprep.subr.mxu0 0.0
        %1712 = vmatpush1.xpose.msra.mxu0 0.0
        %1713 = vmatprep.subr.mxu0 0.0
        %1714 = vmatpush1.xpose.msra.mxu0 0.0
        %1715 = vmatprep.subr.mxu0 0.0
        %1716 = vmatpush1.xpose.msra.mxu0 0.0
        %1717 = vmatprep.subr.mxu0 0.0
        %1718 = vmatpush1.xpose.msra.mxu0 0.0
        %1719 = vmatprep.subr.mxu0 0.0
        %1720 = vmatpush1.xpose.msra.mxu0 0.0
        %1721 = vmatprep.subr.mxu0 0.0
        %1722 = vmatpush1.xpose.msra.mxu0 0.0
        %1723 = vmatprep.subr.mxu0 0.0
        %1724 = vmatpush1.xpose.msra.mxu0 0.0
        %1725 = vmatprep.subr.mxu0 0.0
        %1726 = vmatpush1.xpose.msra.mxu0 0.0
        %1727 = vmatprep.subr.mxu0 0.0
        %1728 = vmatpush1.xpose.msra.mxu0 0.0
        %1729 = vmatprep.subr.mxu0 0.0
        %1730 = vmatpush1.xpose.msra.mxu0 0.0
        %1731 = vmatprep.subr.mxu0 0.0
        %1732 = vmatpush1.xpose.msra.mxu0 0.0
        %1733 = vmatprep.subr.mxu0 0.0
        %1734 = vmatpush1.xpose.msra.mxu0 0.0
        %1735 = vmatprep.subr.mxu0 0.0
        %1736 = vmatpush1.xpose.msra.mxu0 0.0
        %1737 = vmatprep.subr.mxu0 0.0
        %1738 = vmatpush1.xpose.msra.mxu0 0.0
        %1739 = vmatprep.subr.mxu0 0.0
        %1740 = vmatpush1.xpose.msra.mxu0 0.0
        %1741 = vmatprep.subr.mxu0 0.0
        %1742 = vmatpush1.xpose.msra.mxu0 0.0
        %1743 = vmatprep.subr.mxu0 0.0
        %1744 = vmatpush1.xpose.msra.mxu0 0.0
        %1745 = vmatprep.subr.mxu0 0.0
        %1746 = vmatpush1.xpose.msra.mxu0 0.0
        %1747 = vmatprep.subr.mxu0 0.0
        %1748 = vmatpush1.xpose.msra.mxu0 0.0
        %1749 = vmatprep.subr.mxu0 0.0
        %1750 = vmatpush1.xpose.msra.mxu0 0.0
        %1751 = vmatprep.subr.mxu0 0.0
        %1752 = vmatpush1.xpose.msra.mxu0 0.0
        %1753 = vmatprep.subr.mxu0 0.0
        %1754 = vmatpush1.xpose.msra.mxu0 0.0
        %1755 = vmatprep.subr.mxu0 0.0
        %1756 = vmatpush1.xpose.msra.mxu0 0.0
        %1757 = vmatprep.subr.mxu0 0.0
        %1758 = vmatpush1.xpose.msra.mxu0 0.0
        %1759 = vmatprep.subr.mxu0 0.0
        %1760 = vmatpush1.xpose.msra.mxu0 0.0
        %1761 = vmatprep.subr.mxu0 0.0
        %1762 = vmatpush1.xpose.msra.mxu0 0.0
        %1763 = vmatprep.subr.mxu0 0.0
        %1764 = vmatpush1.xpose.msra.mxu0 0.0
        %1765 = vmatprep.subr.mxu0 0.0
        %1766 = vmatpush1.xpose.msra.mxu0 0.0
        %1767 = vmatprep.subr.mxu0 0.0
        %1768 = vmatpush1.xpose.msra.mxu0 0.0
        %1769 = vmatprep.subr.mxu0 0.0
        %1770 = vmatpush1.xpose.msra.mxu0 0.0
        %1771 = vmatprep.mubr.f32.mxu0 %v369
        %1772 = vmatmul.mubr.f32.gmra.mrb[0].mxu0 %v368
        %v1773 = vpop.f32.mrb[0].mxu0
        %v1774 = vadd.f32 %v1704, %v1773
        %v1775 = vpop.f32.mrb[0].mxu0
        %1776 = vdwg.mxu0
        %1777 = vmatprep.subr.mxu0 %v403
        %1778 = vmatpush1.xpose.msra.mxu0 %v402
        %1779 = vmatprep.subr.mxu0 %v435
        %1780 = vmatpush1.xpose.msra.mxu0 %v434
        %1781 = vmatprep.subr.mxu0 0.0
        %1782 = vmatpush1.xpose.msra.mxu0 0.0
        %1783 = vmatprep.subr.mxu0 0.0
        %1784 = vmatpush1.xpose.msra.mxu0 0.0
        %1785 = vmatprep.subr.mxu0 0.0
        %1786 = vmatpush1.xpose.msra.mxu0 0.0
        %1787 = vmatprep.subr.mxu0 0.0
        %1788 = vmatpush1.xpose.msra.mxu0 0.0
        %1789 = vmatprep.subr.mxu0 0.0
        %1790 = vmatpush1.xpose.msra.mxu0 0.0
        %1791 = vmatprep.subr.mxu0 0.0
        %1792 = vmatpush1.xpose.msra.mxu0 0.0
        %1793 = vmatprep.subr.mxu0 0.0
        %1794 = vmatpush1.xpose.msra.mxu0 0.0
        %1795 = vmatprep.subr.mxu0 0.0
        %1796 = vmatpush1.xpose.msra.mxu0 0.0
        %1797 = vmatprep.subr.mxu0 0.0
        %1798 = vmatpush1.xpose.msra.mxu0 0.0
        %1799 = vmatprep.subr.mxu0 0.0
        %1800 = vmatpush1.xpose.msra.mxu0 0.0
        %1801 = vmatprep.subr.mxu0 0.0
        %1802 = vmatpush1.xpose.msra.mxu0 0.0
        %1803 = vmatprep.subr.mxu0 0.0
        %1804 = vmatpush1.xpose.msra.mxu0 0.0
        %1805 = vmatprep.subr.mxu0 0.0
        %1806 = vmatpush1.xpose.msra.mxu0 0.0
        %1807 = vmatprep.subr.mxu0 0.0
        %1808 = vmatpush1.xpose.msra.mxu0 0.0
        %1809 = vmatprep.subr.mxu0 0.0
        %1810 = vmatpush1.xpose.msra.mxu0 0.0
        %1811 = vmatprep.subr.mxu0 0.0
        %1812 = vmatpush1.xpose.msra.mxu0 0.0
        %1813 = vmatprep.subr.mxu0 0.0
        %1814 = vmatpush1.xpose.msra.mxu0 0.0
        %1815 = vmatprep.subr.mxu0 0.0
        %1816 = vmatpush1.xpose.msra.mxu0 0.0
        %1817 = vmatprep.subr.mxu0 0.0
        %1818 = vmatpush1.xpose.msra.mxu0 0.0
        %1819 = vmatprep.subr.mxu0 0.0
        %1820 = vmatpush1.xpose.msra.mxu0 0.0
        %1821 = vmatprep.subr.mxu0 0.0
        %1822 = vmatpush1.xpose.msra.mxu0 0.0
        %1823 = vmatprep.subr.mxu0 0.0
        %1824 = vmatpush1.xpose.msra.mxu0 0.0
        %1825 = vmatprep.subr.mxu0 0.0
        %1826 = vmatpush1.xpose.msra.mxu0 0.0
        %1827 = vmatprep.subr.mxu0 0.0
        %1828 = vmatpush1.xpose.msra.mxu0 0.0
        %1829 = vmatprep.subr.mxu0 0.0
        %1830 = vmatpush1.xpose.msra.mxu0 0.0
        %1831 = vmatprep.subr.mxu0 0.0
        %1832 = vmatpush1.xpose.msra.mxu0 0.0
        %1833 = vmatprep.subr.mxu0 0.0
        %1834 = vmatpush1.xpose.msra.mxu0 0.0
        %1835 = vmatprep.subr.mxu0 0.0
        %1836 = vmatpush1.xpose.msra.mxu0 0.0
        %1837 = vmatprep.subr.mxu0 0.0
        %1838 = vmatpush1.xpose.msra.mxu0 0.0
        %1839 = vmatprep.subr.mxu0 0.0
        %1840 = vmatpush1.xpose.msra.mxu0 0.0
        %1841 = vmatprep.mubr.f32.mxu0 %v371
        %1842 = vmatmul.mubr.f32.gmra.mrb[0].mxu0 %v370
        %v1843 = vpop.f32.mrb[0].mxu0
        %v1844 = vadd.f32 %v1774, %v1843
        %v1845 = vpop.f32.mrb[0].mxu0
        %1846 = vdwg.mxu0
        %1847 = vmatprep.subr.mxu0 %v405
        %1848 = vmatpush1.xpose.msra.mxu0 %v404
        %1849 = vmatprep.subr.mxu0 %v437
        %1850 = vmatpush1.xpose.msra.mxu0 %v436
        %1851 = vmatprep.subr.mxu0 0.0
        %1852 = vmatpush1.xpose.msra.mxu0 0.0
        %1853 = vmatprep.subr.mxu0 0.0
        %1854 = vmatpush1.xpose.msra.mxu0 0.0
        %1855 = vmatprep.subr.mxu0 0.0
        %1856 = vmatpush1.xpose.msra.mxu0 0.0
        %1857 = vmatprep.subr.mxu0 0.0
        %1858 = vmatpush1.xpose.msra.mxu0 0.0
        %1859 = vmatprep.subr.mxu0 0.0
        %1860 = vmatpush1.xpose.msra.mxu0 0.0
        %1861 = vmatprep.subr.mxu0 0.0
        %1862 = vmatpush1.xpose.msra.mxu0 0.0
        %1863 = vmatprep.subr.mxu0 0.0
        %1864 = vmatpush1.xpose.msra.mxu0 0.0
        %1865 = vmatprep.subr.mxu0 0.0
        %1866 = vmatpush1.xpose.msra.mxu0 0.0
        %1867 = vmatprep.subr.mxu0 0.0
        %1868 = vmatpush1.xpose.msra.mxu0 0.0
        %1869 = vmatprep.subr.mxu0 0.0
        %1870 = vmatpush1.xpose.msra.mxu0 0.0
        %1871 = vmatprep.subr.mxu0 0.0
        %1872 = vmatpush1.xpose.msra.mxu0 0.0
        %1873 = vmatprep.subr.mxu0 0.0
        %1874 = vmatpush1.xpose.msra.mxu0 0.0
        %1875 = vmatprep.subr.mxu0 0.0
        %1876 = vmatpush1.xpose.msra.mxu0 0.0
        %1877 = vmatprep.subr.mxu0 0.0
        %1878 = vmatpush1.xpose.msra.mxu0 0.0
        %1879 = vmatprep.subr.mxu0 0.0
        %1880 = vmatpush1.xpose.msra.mxu0 0.0
        %1881 = vmatprep.subr.mxu0 0.0
        %1882 = vmatpush1.xpose.msra.mxu0 0.0
        %1883 = vmatprep.subr.mxu0 0.0
        %1884 = vmatpush1.xpose.msra.mxu0 0.0
        %1885 = vmatprep.subr.mxu0 0.0
        %1886 = vmatpush1.xpose.msra.mxu0 0.0
        %1887 = vmatprep.subr.mxu0 0.0
        %1888 = vmatpush1.xpose.msra.mxu0 0.0
        %1889 = vmatprep.subr.mxu0 0.0
        %1890 = vmatpush1.xpose.msra.mxu0 0.0
        %1891 = vmatprep.subr.mxu0 0.0
        %1892 = vmatpush1.xpose.msra.mxu0 0.0
        %1893 = vmatprep.subr.mxu0 0.0
        %1894 = vmatpush1.xpose.msra.mxu0 0.0
        %1895 = vmatprep.subr.mxu0 0.0
        %1896 = vmatpush1.xpose.msra.mxu0 0.0
        %1897 = vmatprep.subr.mxu0 0.0
        %1898 = vmatpush1.xpose.msra.mxu0 0.0
        %1899 = vmatprep.subr.mxu0 0.0
        %1900 = vmatpush1.xpose.msra.mxu0 0.0
        %1901 = vmatprep.subr.mxu0 0.0
        %1902 = vmatpush1.xpose.msra.mxu0 0.0
        %1903 = vmatprep.subr.mxu0 0.0
        %1904 = vmatpush1.xpose.msra.mxu0 0.0
        %1905 = vmatprep.subr.mxu0 0.0
        %1906 = vmatpush1.xpose.msra.mxu0 0.0
        %1907 = vmatprep.subr.mxu0 0.0
        %1908 = vmatpush1.xpose.msra.mxu0 0.0
        %1909 = vmatprep.subr.mxu0 0.0
        %1910 = vmatpush1.xpose.msra.mxu0 0.0
        %1911 = vmatprep.mubr.f32.mxu0 %v373
        %1912 = vmatmul.mubr.f32.gmra.mrb[0].mxu0 %v372
        %v1913 = vpop.f32.mrb[0].mxu0
        %v1914 = vadd.f32 %v1844, %v1913
        %v1915 = vpop.f32.mrb[0].mxu0
        %1916 = vdwg.mxu0
        %v1917 = vmul.f32 %v1914, %v445
        %v1918 = vsel %vm446, %v1917, 0.0
        %1919 = vadd.xlane.f32.xlu0 %v1918
        %v1920 = vpop.xlane.xlu0 %1919
        %v1921 = vmul.f32 %v1920, %v339
        %v1922 = vld [vmem:[#allocation3] sm:$0x1]
        %v1923 = vsub.f32 %v796, %v1921
        %v1924 = vrot.slane %v1923, 4
        %v1925 = vadd.f32 %v1923, %v1924
        %v1926 = vrot.slane %v1925, 2
        %v1927 = vadd.f32 %v1925, %v1926
        %v1928 = vrot.slane %v1927, 1
        %v1929 = vadd.f32 %v1927, %v1928
        %v1930 = vadd.f32 %v1922, %v1929
        %1931 = vst.msk [vmem:[#allocation3] sm:$0x1] %vm473, %v1930
        // Predicated region
        $region57: #{tpu_custom_call.1} parent=35 // pred_check
          %p1932 = pneg %p324
        $region58: #{tpu_custom_call.1} parent=35 // pred_check_branch
          %1934 = sbr.rel (%p1932) target = $region60
        $region59: #{tpu_custom_call.1} parent=35 // pred_region
          %v1935 = vld [vmem:[#allocation2] sm:$0x1]
          %v1936 = vmul.f32 %v1935, 0.125
          %v1937 = vld [vmem:[#allocation3] sm:$0x1]
          %v1938 = vmul.f32 %v1937, 1.5258789e-05
          %v1939 = vadd.f32 %v1936, %v1938
          %v1941 = vlaneseq
          %v1942 = vshrl.u32 %v1941, 7
          %v1943 = vsub.s32 0, %v1942
          %v1944 = vrot.slane %v1939, %v1943
          %1945 = vset.pattern.permute.xlu0 0
          %1946 = vperm.xlu0 %1945, %v1944
          %v1947 = vpop.permute.xlu0 %1946
          %1949 = vst [vmem:[%s320] sm:$0xff] %v1947
        $region60: #{tpu_custom_call.1} parent=35 // pred_fallthru
          _
        %s1950 = sand.u32 %s150, 1
        %s1951 = scalar_lea.sflag [#allocation6], %s1950
        %s1952 = sand.u32 %s150, 1
        %s1953 = smul.addr %s1952, 8
        %s1954 = scalar_lea.vmem [#allocation12], %s1953
        // Predicated region
        $region61: #{tpu_custom_call.1} parent=35 // pred_check
          %p1955 = pneg %p160
        $region62: #{tpu_custom_call.1} parent=35 // pred_check_branch
          %1957 = sbr.rel (%p1955) target = $region64
        $region63: #{tpu_custom_call.1} parent=35 // pred_region
          %s1959 = ssub.s32 128, 128
          %1960 = vsyncadd %s1951, %s1959
          %s1961 = smul.addr %s29, 128
          %s1962 = scalar_lea.hbm %s4, %s1961
          %s1964 = sshll.u32 %s1954, 4
          %s1965 = int_to_ptr.vmem [resolvable:$true] %s1964
          %1967 = dma.vmem_to_hbm [thread:$0]  %s1965, 128, %s1962, %s1951
        $region64: #{tpu_custom_call.1} parent=35 // pred_fallthru
          _
      $region36: #{tpu_custom_call.1} parent=5 // pred_fallthru
        _
      %p1968 = scmp.le.s32.totalorder 2, %s20
      // Predicated region
      $region65: #{tpu_custom_call.1} parent=5 // pred_check
        %p1969 = pneg %p1968
      $region66: #{tpu_custom_call.1} parent=5 // pred_check_branch
        %1971 = sbr.rel (%p1969) target = $region68
      $region67: #{tpu_custom_call.1} parent=5 // pred_region
        %s1972 = ssub.s32 %s20, 2
        // Predicated region
        $region69: #{tpu_custom_call.1} parent=67 // pred_check
          %p1973 = pneg %p166
        $region70: #{tpu_custom_call.1} parent=67 // pred_check_branch
          %1975 = sbr.rel (%p1973) target = $region72
        $region71: #{tpu_custom_call.1} parent=67 // pred_region
          %s1976 = sand.u32 %s151, 1
          %s1977 = scalar_lea.sflag [#allocation6], %s1976
          %s1978 = sand.u32 %s151, 1
          %s1979 = smul.addr %s1978, 8
          %s1980 = scalar_lea.vmem [#allocation12], %s1979
          %1981 = dma.done %s1977, 128
        $region72: #{tpu_custom_call.1} parent=67 // pred_fallthru
          _
      $region68: #{tpu_custom_call.1} parent=5 // pred_fallthru
        _
    $region6: #{tpu_custom_call.1} parent=1 // loop_footer
      %s24 = sadd.s32 1, %s20
    $region7: #{tpu_custom_call.1} parent=1 // loop_footer_branch
      %19 = sbr.rel target = $region3
    $region8: #{tpu_custom_call.1} parent=1 // loop_exit
      _
    %1982 = vsyncpa [#allocation5], 1
    %s1983 = scalar_lea.sflag [#allocation5], 1
    %1984 = vsyncpa %s1983, 1
    %1985 = vsyncpa [#allocation8], 1
    %s1986 = scalar_lea.sflag [#allocation8], 1
    %1987 = vsyncpa %s1986, 1
    %1988 = vsyncpa [#allocation11], 1
    %1989 = vsyncpa [#allocation6], 1
    %s1990 = scalar_lea.sflag [#allocation6], 1
    %1991 = vsyncpa %s1990, 1

</llo_original>
